<compile_context>
chip_gen: v7x
topology: tpu7x:2x2x1
jax: 0.10.0
libtpu: 0.0.40
codegen_flags: <defaults>
</compile_context>

<pallas_src>
import numpy as np
import jax
import jax.numpy as jnp
from jax.experimental import pallas as pl
from jax.experimental.pallas import tpu as pltpu

BATCH = 2
NUM_CLASSES = 4
C1, C2 = 16, 32          # conv1 / conv2 output channels
KK = 5                   # conv kernel size (padding 2, stride 1)
BN_EPS = 1e-5

GRID = 18                # 14x14 pooled map + 2-halo each side
GFLAT = GRID * GRID      # 324 flat grid positions
MAP_OFF = 38             # lane offset of grid position (0,0) inside a phase block
POOL1_W = 400            # width of the pooled-map lane window (38 + 324 + 38)
PHASE_STRIDE = 512       # lane stride between conv1 pooling-phase blocks (128-aligned)
SEL_STRIDE = 64          # lane stride between max-pool-2 phase blocks


# ---------------------------------------------------------------------------
# Static gather / selection tables (tiny, built once with numpy).
# ---------------------------------------------------------------------------
def _build_tables():
    # conv1 im2col gather tables, laid out directly in the kernel's conv1 output
    # lane space: per pooling phase a 512-lane block whose lanes
    # [MAP_OFF, MAP_OFF+324) hold the 18x18 zero-halo grid of the pooled 14x14 map
    # (grid position (Y, X) at lane MAP_OFF + Y*18 + X; payload at Y, X in [2, 16)).
    lanes = 4 * PHASE_STRIDE
    GY = np.zeros((25, lanes), np.int32)
    GX = np.zeros((25, lanes), np.int32)
    VAL = np.zeros((1, lanes), np.float32)
    for ph in range(4):
        dy, dx = ph // 2, ph % 2
        for Y in range(2, 16):
            for X in range(2, 16):
                col = ph * PHASE_STRIDE + MAP_OFF + Y * GRID + X
                VAL[0, col] = 1.0
                py, px = Y - 2, X - 2
                for ky in range(KK):
                    for kx in range(KK):
                        GY[ky * KK + kx, col] = 2 * py + dy + ky
                        GX[ky * KK + kx, col] = 2 * px + dx + kx

    # 2x2/stride-2 max-pool selection matrix: 4 pooling phases side by side
    # (64-lane blocks), operating on the 324-lane flat grid of the conv2 output.
    SEL = np.zeros((GFLAT, 4 * SEL_STRIDE), np.float32)
    for dy in range(2):
        for dx in range(2):
            ph = dy * 2 + dx
            for qy in range(7):
                for qx in range(7):
                    f = (2 * qy + dy + 2) * GRID + (2 * qx + dx + 2)
                    SEL[f, ph * SEL_STRIDE + qy * 7 + qx] = 1.0

    EYE = np.zeros((NUM_CLASSES, 128), np.float32)
    for c in range(NUM_CLASSES):
        EYE[c, c] = 1.0
    return GY, GX, VAL, SEL, EYE


_GY, _GX, _VAL, _SEL, _EYE = _build_tables()


# ---------------------------------------------------------------------------
# Pallas kernel: whole ConvNet forward for one image, entirely in VMEM.
# ---------------------------------------------------------------------------
def convnet_kernel(p1_ref, w1_ref, w2_ref, b2_ref, sel_ref, wf_ref, bf_ref,
                   eye_ref, o_ref):
    # ---- conv1 + folded BN1 (bias via indicator column): ONE bf16 dot ----------
    h1 = jnp.dot(w1_ref[...], p1_ref[...],
                 preferred_element_type=jnp.float32)                  # (16, 2048)
    # lane-aligned phase slices; elementwise max over phases == MaxPool2d(2,2)
    pool1 = jnp.maximum(
        jnp.maximum(h1[:, 0:POOL1_W],
                    h1[:, PHASE_STRIDE:PHASE_STRIDE + POOL1_W]),
        jnp.maximum(h1[:, 2 * PHASE_STRIDE:2 * PHASE_STRIDE + POOL1_W],
                    h1[:, 3 * PHASE_STRIDE:3 * PHASE_STRIDE + POOL1_W]))
    pool1 = jnp.maximum(pool1, 0.0).astype(jnp.bfloat16)              # (16, 400)
    # halo lanes of pool1 are exactly zero (zero patches + zero indicator column),
    # so conv2's zero padding is handled structurally -- no masks needed.

    # ---- conv2 + folded BN2: ONE K=400 dot over lane-shifted halo windows ------
    wins = []
    for ky in range(KK):
        for kx in range(KK):
            d = (ky - 2) * GRID + (kx - 2)                            # constant shift
            wins.append(pool1[:, MAP_OFF + d: MAP_OFF + d + GFLAT])   # (16, 324)
    patches = jnp.concatenate(wins, axis=0)                           # (400, 324)
    h2 = jnp.dot(w2_ref[...], patches,
                 preferred_element_type=jnp.float32)                  # (32, 324)
    h2 = jnp.maximum(h2 + b2_ref[...], 0.0)

    # ---- 2x2 max-pool: one 0/1 selection dot (4 phases side by side) + 3 maxes -
    g = jnp.dot(h2, sel_ref[...], preferred_element_type=jnp.float32)  # (32, 256)
    pooled = jnp.maximum(
        jnp.maximum(g[:, 0:49], g[:, SEL_STRIDE:SEL_STRIDE + 49]),
        jnp.maximum(g[:, 2 * SEL_STRIDE:2 * SEL_STRIDE + 49],
                    g[:, 3 * SEL_STRIDE:3 * SEL_STRIDE + 49]))         # (32, 49)

    # ---- fc (vectorized epilogue, lane-dense output row) -----------------------
    prod = pooled[None, :, :] * wf_ref[...]                            # (4, 32, 49)
    s = jnp.sum(jnp.sum(prod, axis=1), axis=1, keepdims=True)          # (4, 1)
    out_row = bf_ref[...] + jnp.sum(s * eye_ref[...], axis=0, keepdims=True)
    o_ref[...] = out_row.astype(o_ref.dtype)                           # (1, 128)


# ---------------------------------------------------------------------------
# Wrapper: BN folding, weight packing, conv1 im2col (layout glue), pallas_call.
# ---------------------------------------------------------------------------
def convnet_forward(x, params):
    (w1, b1, g1, be1, m1, v1, w2, b2, g2, be2, m2, v2, wf, bf) = params
    n = x.shape[0]
    assert x.shape[1:] == (1, 28, 28)

    # fold BatchNorm (inference / running-stats form) into conv weights & biases
    s1 = g1 / jnp.sqrt(v1 + BN_EPS)
    w1f = w1 * s1[:, None, None, None]
    b1f = s1 * (b1 - m1) + be1
    s2 = g2 / jnp.sqrt(v2 + BN_EPS)
    w2f = w2 * s2[:, None, None, None]
    b2f = s2 * (b2 - m2) + be2

    # conv1 weights + folded bias as one (16, 26) bf16 matrix (bias via indicator)
    w1_aug = jnp.concatenate(
        [w1f[:, 0].reshape(C1, 25), b1f[:, None]], axis=1).astype(jnp.bfloat16)
    # conv2 weights as (32, 400): [co, (ky*5+kx)*16 + ci]
    w2_mat = jnp.transpose(w2f, (0, 2, 3, 1)).reshape(C2, 25 * C1).astype(jnp.bfloat16)
    b2_col = b2f.reshape(C2, 1).astype(jnp.float32)
    # fc weights as (4, 32, 49); bias as a lane-dense 128-wide row
    wf_r = wf.reshape(NUM_CLASSES, C2, 49).astype(jnp.float32)
    bf_row = jnp.zeros((1, 128), jnp.float32).at[0, :NUM_CLASSES].set(bf)

    gy = jnp.asarray(_GY)
    gx = jnp.asarray(_GX)
    val = jnp.asarray(_VAL)
    sel = jnp.asarray(_SEL)
    eye = jnp.asarray(_EYE)

    # conv1 im2col, phase-major / halo-grid lane layout (layout glue only:
    # N*26*2048 bf16 ~ 104 KB per image)
    xp = jnp.pad(x[:, 0].astype(jnp.float32), ((0, 0), (2, 2), (2, 2)))   # (N,32,32)
    pat = xp[:, gy, gx] * val                                             # (N,25,2048)
    ind = jnp.broadcast_to(val[None], (n, 1, 4 * PHASE_STRIDE))
    p1 = jnp.concatenate([pat, ind], axis=1).astype(jnp.bfloat16)         # (N,26,2048)

    out = pl.pallas_call(
        convnet_kernel,
        out_shape=jax.ShapeDtypeStruct((n, 1, 128), jnp.float32),
        grid_spec=pltpu.PrefetchScalarGridSpec(
            num_scalar_prefetch=0,
            grid=(n,),
            in_specs=[
                pl.BlockSpec((pl.Squeezed(), 26, 4 * PHASE_STRIDE),
                             lambda b: (b, 0, 0)),
                pl.BlockSpec((C1, 26), lambda b: (0, 0)),
                pl.BlockSpec((C2, 25 * C1), lambda b: (0, 0)),
                pl.BlockSpec((C2, 1), lambda b: (0, 0)),
                pl.BlockSpec((GFLAT, 4 * SEL_STRIDE), lambda b: (0, 0)),
                pl.BlockSpec((NUM_CLASSES, C2, 49), lambda b: (0, 0, 0)),
                pl.BlockSpec((1, 128), lambda b: (0, 0)),
                pl.BlockSpec((NUM_CLASSES, 128), lambda b: (0, 0)),
            ],
            out_specs=pl.BlockSpec((pl.Squeezed(), 1, 128),
                                   lambda b: (b, 0, 0)),
        ),
        compiler_params=pltpu.CompilerParams(
            dimension_semantics=("parallel",)),
    )(p1, w1_aug, w2_mat, b2_col, sel, wf_r, bf_row, eye)

    return out[:, 0, :NUM_CLASSES]


# ---------------------------------------------------------------------------
# Pure-JAX reference (exactly the PyTorch forward, BN in eval mode).
# ---------------------------------------------------------------------------
def reference_forward(x, params):
    (w1, b1, g1, be1, m1, v1, w2, b2, g2, be2, m2, v2, wf, bf) = params

    def conv(y, w, b):
        out = jax.lax.conv_general_dilated(
            y, w, window_strides=(1, 1), padding=((2, 2), (2, 2)),
            dimension_numbers=("NCHW", "OIHW", "NCHW"))
        return out + b[None, :, None, None]

    def bn(y, g, be, m, v):
        return (y - m[None, :, None, None]) * (
            g[None, :, None, None] / jnp.sqrt(v[None, :, None, None] + BN_EPS)
        ) + be[None, :, None, None]

    def pool(y):
        return jax.lax.reduce_window(
            y, -jnp.inf, jax.lax.max,
            window_dimensions=(1, 1, 2, 2), window_strides=(1, 1, 2, 2),
            padding="VALID")

    h = pool(jnp.maximum(bn(conv(x, w1, b1), g1, be1, m1, v1), 0.0))
    h = pool(jnp.maximum(bn(conv(h, w2, b2), g2, be2, m2, v2), 0.0))
    h = h.reshape(x.shape[0], -1)
    return h @ wf.T + bf[None, :]


if __name__ == "__main__":
    key = jax.random.PRNGKey(0)
    ks = jax.random.split(key, 16)

    x = jax.random.normal(ks[0], (BATCH, 1, 28, 28), jnp.float32)
    w1 = jax.random.normal(ks[1], (C1, 1, KK, KK), jnp.float32) * 0.1
    b1 = jax.random.normal(ks[2], (C1,), jnp.float32) * 0.1
    g1 = 1.0 + 0.1 * jax.random.normal(ks[3], (C1,), jnp.float32)
    be1 = 0.1 * jax.random.normal(ks[4], (C1,), jnp.float32)
    m1 = 0.1 * jax.random.normal(ks[5], (C1,), jnp.float32)
    v1 = jax.random.uniform(ks[6], (C1,), jnp.float32, 0.5, 1.5)
    w2 = jax.random.normal(ks[7], (C2, C1, KK, KK), jnp.float32) * 0.05
    b2 = jax.random.normal(ks[8], (C2,), jnp.float32) * 0.1
    g2 = 1.0 + 0.1 * jax.random.normal(ks[9], (C2,), jnp.float32)
    be2 = 0.1 * jax.random.normal(ks[10], (C2,), jnp.float32)
    m2 = 0.1 * jax.random.normal(ks[11], (C2,), jnp.float32)
    v2 = jax.random.uniform(ks[12], (C2,), jnp.float32, 0.5, 1.5)
    wf = jax.random.normal(ks[13], (NUM_CLASSES, C2 * 7 * 7), jnp.float32) * 0.05
    bf = jax.random.normal(ks[14], (NUM_CLASSES,), jnp.float32) * 0.1
    params = (w1, b1, g1, be1, m1, v1, w2, b2, g2, be2, m2, v2, wf, bf)

    y = jax.jit(convnet_forward)(x, params)
    y = jax.block_until_ready(y)

    y_ref = reference_forward(x, params)
    assert y.shape == (BATCH, NUM_CLASSES)
    max_err = float(jnp.max(jnp.abs(y - y_ref)))
    assert jnp.allclose(y, y_ref, rtol=2e-2, atol=2e-2), \
        f"mismatch: max abs err {max_err}"

    print("KERNEL_OK")
</pallas_src>

<mosaic_0001>
module attributes {stable_mosaic.version = 11 : i64} {
  func.func @convnet_kernel(%arg0: i32, %arg1: memref<1x26x2048xbf16, #tpu.memory_space<vmem>>, %arg2: memref<16x26xbf16, #tpu.memory_space<vmem>>, %arg3: memref<32x400xbf16, #tpu.memory_space<vmem>>, %arg4: memref<32x1xf32, #tpu.memory_space<vmem>>, %arg5: memref<324x256xf32, #tpu.memory_space<vmem>>, %arg6: memref<4x32x49xf32, #tpu.memory_space<vmem>>, %arg7: memref<1x128xf32, #tpu.memory_space<vmem>>, %arg8: memref<4x128xf32, #tpu.memory_space<vmem>>, %arg9: memref<1x1x128xf32, #tpu.memory_space<vmem>>) attributes {dimension_semantics = [#tpu.dimension_semantics<parallel>], iteration_bounds = array<i64: 2>, scalar_prefetch = 0 : i64, scratch_operands = 0 : i64, tpu.core_type = #tpu.core_type<tc>, window_params = [{transform_indices = @transform_0, window_bounds = array<i64: 1, 26, 2048>}, {pipeline_mode = #tpu.pipeline_mode<synchronous>, transform_indices = @transform_1, window_bounds = array<i64: 16, 26>}, {pipeline_mode = #tpu.pipeline_mode<synchronous>, transform_indices = @transform_2, window_bounds = array<i64: 32, 400>}, {pipeline_mode = #tpu.pipeline_mode<synchronous>, transform_indices = @transform_3, window_bounds = array<i64: 32, 1>}, {pipeline_mode = #tpu.pipeline_mode<synchronous>, transform_indices = @transform_4, window_bounds = array<i64: 324, 256>}, {pipeline_mode = #tpu.pipeline_mode<synchronous>, transform_indices = @transform_5, window_bounds = array<i64: 4, 32, 49>}, {pipeline_mode = #tpu.pipeline_mode<synchronous>, transform_indices = @transform_6, window_bounds = array<i64: 1, 128>}, {pipeline_mode = #tpu.pipeline_mode<synchronous>, transform_indices = @transform_7, window_bounds = array<i64: 4, 128>}, {transform_indices = @transform_8, window_bounds = array<i64: 1, 1, 128>}]} {
    %c0 = arith.constant 0 : index
    %c0_0 = arith.constant 0 : index
    %0 = vector.load %arg2[%c0, %c0_0] : memref<16x26xbf16, #tpu.memory_space<vmem>>, vector<16x26xbf16>
    %c0_1 = arith.constant 0 : index
    %c0_2 = arith.constant 0 : index
    %c0_3 = arith.constant 0 : index
    %1 = vector.load %arg1[%c0_1, %c0_2, %c0_3] : memref<1x26x2048xbf16, #tpu.memory_space<vmem>>, vector<1x26x2048xbf16>
    %2 = vector.shape_cast %1 : vector<1x26x2048xbf16> to vector<26x2048xbf16>
    %cst = arith.constant dense<0.000000e+00> : vector<16x2048xf32>
    %3 = tpu.matmul %0, %2, %cst {dimension_numbers = #tpu.dot_dimension_numbers<[1], [0], [0], [1], [0, 0, 1, 1], [], []>} : vector<16x26xbf16>, vector<26x2048xbf16>, vector<16x2048xf32> -> vector<16x2048xf32>
    %4 = vector.extract_strided_slice %3 {offsets = [0, 0], sizes = [16, 400], strides = [1, 1]} : vector<16x2048xf32> to vector<16x400xf32>
    %5 = vector.extract_strided_slice %3 {offsets = [0, 512], sizes = [16, 400], strides = [1, 1]} : vector<16x2048xf32> to vector<16x400xf32>
    %6 = arith.maximumf %4, %5 : vector<16x400xf32>
    %7 = vector.extract_strided_slice %3 {offsets = [0, 1024], sizes = [16, 400], strides = [1, 1]} : vector<16x2048xf32> to vector<16x400xf32>
    %8 = vector.extract_strided_slice %3 {offsets = [0, 1536], sizes = [16, 400], strides = [1, 1]} : vector<16x2048xf32> to vector<16x400xf32>
    %9 = arith.maximumf %7, %8 : vector<16x400xf32>
    %10 = arith.maximumf %6, %9 : vector<16x400xf32>
    %cst_4 = arith.constant 0.000000e+00 : f32
    %11 = vector.broadcast %cst_4 : f32 to vector<16x400xf32>
    %12 = arith.maximumf %10, %11 : vector<16x400xf32>
    %13 = arith.truncf %12 : vector<16x400xf32> to vector<16x400xbf16>
    %14 = vector.extract_strided_slice %13 {offsets = [0, 0], sizes = [16, 324], strides = [1, 1]} : vector<16x400xbf16> to vector<16x324xbf16>
    %15 = vector.extract_strided_slice %13 {offsets = [0, 1], sizes = [16, 324], strides = [1, 1]} : vector<16x400xbf16> to vector<16x324xbf16>
    %16 = vector.extract_strided_slice %13 {offsets = [0, 2], sizes = [16, 324], strides = [1, 1]} : vector<16x400xbf16> to vector<16x324xbf16>
    %17 = vector.extract_strided_slice %13 {offsets = [0, 3], sizes = [16, 324], strides = [1, 1]} : vector<16x400xbf16> to vector<16x324xbf16>
    %18 = vector.extract_strided_slice %13 {offsets = [0, 4], sizes = [16, 324], strides = [1, 1]} : vector<16x400xbf16> to vector<16x324xbf16>
    %19 = vector.extract_strided_slice %13 {offsets = [0, 18], sizes = [16, 324], strides = [1, 1]} : vector<16x400xbf16> to vector<16x324xbf16>
    %20 = vector.extract_strided_slice %13 {offsets = [0, 19], sizes = [16, 324], strides = [1, 1]} : vector<16x400xbf16> to vector<16x324xbf16>
    %21 = vector.extract_strided_slice %13 {offsets = [0, 20], sizes = [16, 324], strides = [1, 1]} : vector<16x400xbf16> to vector<16x324xbf16>
    %22 = vector.extract_strided_slice %13 {offsets = [0, 21], sizes = [16, 324], strides = [1, 1]} : vector<16x400xbf16> to vector<16x324xbf16>
    %23 = vector.extract_strided_slice %13 {offsets = [0, 22], sizes = [16, 324], strides = [1, 1]} : vector<16x400xbf16> to vector<16x324xbf16>
    %24 = vector.extract_strided_slice %13 {offsets = [0, 36], sizes = [16, 324], strides = [1, 1]} : vector<16x400xbf16> to vector<16x324xbf16>
    %25 = vector.extract_strided_slice %13 {offsets = [0, 37], sizes = [16, 324], strides = [1, 1]} : vector<16x400xbf16> to vector<16x324xbf16>
    %26 = vector.extract_strided_slice %13 {offsets = [0, 38], sizes = [16, 324], strides = [1, 1]} : vector<16x400xbf16> to vector<16x324xbf16>
    %27 = vector.extract_strided_slice %13 {offsets = [0, 39], sizes = [16, 324], strides = [1, 1]} : vector<16x400xbf16> to vector<16x324xbf16>
    %28 = vector.extract_strided_slice %13 {offsets = [0, 40], sizes = [16, 324], strides = [1, 1]} : vector<16x400xbf16> to vector<16x324xbf16>
    %29 = vector.extract_strided_slice %13 {offsets = [0, 54], sizes = [16, 324], strides = [1, 1]} : vector<16x400xbf16> to vector<16x324xbf16>
    %30 = vector.extract_strided_slice %13 {offsets = [0, 55], sizes = [16, 324], strides = [1, 1]} : vector<16x400xbf16> to vector<16x324xbf16>
    %31 = vector.extract_strided_slice %13 {offsets = [0, 56], sizes = [16, 324], strides = [1, 1]} : vector<16x400xbf16> to vector<16x324xbf16>
    %32 = vector.extract_strided_slice %13 {offsets = [0, 57], sizes = [16, 324], strides = [1, 1]} : vector<16x400xbf16> to vector<16x324xbf16>
    %33 = vector.extract_strided_slice %13 {offsets = [0, 58], sizes = [16, 324], strides = [1, 1]} : vector<16x400xbf16> to vector<16x324xbf16>
    %34 = vector.extract_strided_slice %13 {offsets = [0, 72], sizes = [16, 324], strides = [1, 1]} : vector<16x400xbf16> to vector<16x324xbf16>
    %35 = vector.extract_strided_slice %13 {offsets = [0, 73], sizes = [16, 324], strides = [1, 1]} : vector<16x400xbf16> to vector<16x324xbf16>
    %36 = vector.extract_strided_slice %13 {offsets = [0, 74], sizes = [16, 324], strides = [1, 1]} : vector<16x400xbf16> to vector<16x324xbf16>
    %37 = vector.extract_strided_slice %13 {offsets = [0, 75], sizes = [16, 324], strides = [1, 1]} : vector<16x400xbf16> to vector<16x324xbf16>
    %38 = vector.extract_strided_slice %13 {offsets = [0, 76], sizes = [16, 324], strides = [1, 1]} : vector<16x400xbf16> to vector<16x324xbf16>
    %39 = tpu.concatenate %14, %15, %16, %17, %18, %19, %20, %21, %22, %23, %24, %25, %26, %27, %28, %29 in 0 : vector<16x324xbf16>, vector<16x324xbf16>, vector<16x324xbf16>, vector<16x324xbf16>, vector<16x324xbf16>, vector<16x324xbf16>, vector<16x324xbf16>, vector<16x324xbf16>, vector<16x324xbf16>, vector<16x324xbf16>, vector<16x324xbf16>, vector<16x324xbf16>, vector<16x324xbf16>, vector<16x324xbf16>, vector<16x324xbf16>, vector<16x324xbf16> -> vector<256x324xbf16>
    %40 = tpu.concatenate %30, %31, %32, %33, %34, %35, %36, %37, %38 in 0 : vector<16x324xbf16>, vector<16x324xbf16>, vector<16x324xbf16>, vector<16x324xbf16>, vector<16x324xbf16>, vector<16x324xbf16>, vector<16x324xbf16>, vector<16x324xbf16>, vector<16x324xbf16> -> vector<144x324xbf16>
    %41 = tpu.concatenate %39, %40 in 0 : vector<256x324xbf16>, vector<144x324xbf16> -> vector<400x324xbf16>
    %c0_5 = arith.constant 0 : index
    %c0_6 = arith.constant 0 : index
    %42 = vector.load %arg3[%c0_5, %c0_6] : memref<32x400xbf16, #tpu.memory_space<vmem>>, vector<32x400xbf16>
    %cst_7 = arith.constant dense<0.000000e+00> : vector<32x324xf32>
    %43 = tpu.matmul %42, %41, %cst_7 {dimension_numbers = #tpu.dot_dimension_numbers<[1], [0], [0], [1], [0, 0, 1, 1], [], []>} : vector<32x400xbf16>, vector<400x324xbf16>, vector<32x324xf32> -> vector<32x324xf32>
    %c0_8 = arith.constant 0 : index
    %c0_9 = arith.constant 0 : index
    %44 = vector.load %arg4[%c0_8, %c0_9] : memref<32x1xf32, #tpu.memory_space<vmem>>, vector<32x1xf32>
    %45 = vector.broadcast %44 : vector<32x1xf32> to vector<32x324xf32>
    %46 = arith.addf %43, %45 : vector<32x324xf32>
    %cst_10 = arith.constant 0.000000e+00 : f32
    %47 = vector.broadcast %cst_10 : f32 to vector<32x324xf32>
    %48 = arith.maximumf %46, %47 : vector<32x324xf32>
    %c0_11 = arith.constant 0 : index
    %c0_12 = arith.constant 0 : index
    %49 = vector.load %arg5[%c0_11, %c0_12] : memref<324x256xf32, #tpu.memory_space<vmem>>, vector<324x256xf32>
    %cst_13 = arith.constant dense<0.000000e+00> : vector<32x256xf32>
    %50 = tpu.matmul %48, %49, %cst_13 {dimension_numbers = #tpu.dot_dimension_numbers<[1], [0], [0], [1], [0, 0, 1, 1], [], []>} : vector<32x324xf32>, vector<324x256xf32>, vector<32x256xf32> -> vector<32x256xf32>
    %51 = vector.extract_strided_slice %50 {offsets = [0, 0], sizes = [32, 49], strides = [1, 1]} : vector<32x256xf32> to vector<32x49xf32>
    %52 = vector.extract_strided_slice %50 {offsets = [0, 64], sizes = [32, 49], strides = [1, 1]} : vector<32x256xf32> to vector<32x49xf32>
    %53 = arith.maximumf %51, %52 : vector<32x49xf32>
    %54 = vector.extract_strided_slice %50 {offsets = [0, 128], sizes = [32, 49], strides = [1, 1]} : vector<32x256xf32> to vector<32x49xf32>
    %55 = vector.extract_strided_slice %50 {offsets = [0, 192], sizes = [32, 49], strides = [1, 1]} : vector<32x256xf32> to vector<32x49xf32>
    %56 = arith.maximumf %54, %55 : vector<32x49xf32>
    %57 = arith.maximumf %53, %56 : vector<32x49xf32>
    %58 = vector.shape_cast %57 : vector<32x49xf32> to vector<1x32x49xf32>
    %c0_14 = arith.constant 0 : index
    %c0_15 = arith.constant 0 : index
    %c0_16 = arith.constant 0 : index
    %59 = vector.load %arg6[%c0_14, %c0_15, %c0_16] : memref<4x32x49xf32, #tpu.memory_space<vmem>>, vector<4x32x49xf32>
    %60 = vector.broadcast %58 : vector<1x32x49xf32> to vector<4x32x49xf32>
    %61 = arith.mulf %60, %59 : vector<4x32x49xf32>
    %cst_17 = arith.constant dense<0.000000e+00> : vector<4x49xf32>
    %62 = vector.multi_reduction <add>, %61, %cst_17 [1] : vector<4x32x49xf32> to vector<4x49xf32>
    %cst_18 = arith.constant dense<0.000000e+00> : vector<4xf32>
    %63 = vector.multi_reduction <add>, %62, %cst_18 [1] : vector<4x49xf32> to vector<4xf32>
    %64 = vector.shape_cast %63 : vector<4xf32> to vector<4x1xf32>
    %c0_19 = arith.constant 0 : index
    %c0_20 = arith.constant 0 : index
    %65 = vector.load %arg7[%c0_19, %c0_20] : memref<1x128xf32, #tpu.memory_space<vmem>>, vector<1x128xf32>
    %c0_21 = arith.constant 0 : index
    %c0_22 = arith.constant 0 : index
    %66 = vector.load %arg8[%c0_21, %c0_22] : memref<4x128xf32, #tpu.memory_space<vmem>>, vector<4x128xf32>
    %67 = vector.broadcast %64 : vector<4x1xf32> to vector<4x128xf32>
    %68 = arith.mulf %67, %66 : vector<4x128xf32>
    %cst_23 = arith.constant dense<0.000000e+00> : vector<128xf32>
    %69 = vector.multi_reduction <add>, %68, %cst_23 [0] : vector<4x128xf32> to vector<128xf32>
    %70 = vector.shape_cast %69 : vector<128xf32> to vector<1x128xf32>
    %71 = arith.addf %65, %70 : vector<1x128xf32>
    %c0_24 = arith.constant 0 : index
    %c0_25 = arith.constant 0 : index
    %c0_26 = arith.constant 0 : index
    %72 = vector.load %arg9[%c0_24, %c0_25, %c0_26] : memref<1x1x128xf32, #tpu.memory_space<vmem>>, vector<1x1x128xf32>
    %73 = vector.shape_cast %72 : vector<1x1x128xf32> to vector<1x128xf32>
    %74 = vector.shape_cast %71 : vector<1x128xf32> to vector<1x1x128xf32>
    tpu.vector_store %arg9[%c0_24, %c0_25, %c0_26], %74 {strides = array<i32>} : memref<1x1x128xf32, #tpu.memory_space<vmem>>, vector<1x1x128xf32>,
    return
  }
  func.func @transform_0(%arg0: i32) -> (i32, i32, i32) {
    %c0_i32 = arith.constant 0 : i32
    %c0_i32_0 = arith.constant 0 : i32
    %c0_i32_1 = arith.constant 0 : i32
    return %arg0, %c0_i32, %c0_i32_0 : i32, i32, i32
  }
  func.func @transform_1(%arg0: i32) -> (i32, i32) {
    %c0_i32 = arith.constant 0 : i32
    %c0_i32_0 = arith.constant 0 : i32
    %c0_i32_1 = arith.constant 0 : i32
    return %c0_i32, %c0_i32_0 : i32, i32
  }
  func.func @transform_2(%arg0: i32) -> (i32, i32) {
    %c0_i32 = arith.constant 0 : i32
    %c0_i32_0 = arith.constant 0 : i32
    %c0_i32_1 = arith.constant 0 : i32
    return %c0_i32, %c0_i32_0 : i32, i32
  }
  func.func @transform_3(%arg0: i32) -> (i32, i32) {
    %c0_i32 = arith.constant 0 : i32
    %c0_i32_0 = arith.constant 0 : i32
    %c0_i32_1 = arith.constant 0 : i32
    return %c0_i32, %c0_i32_0 : i32, i32
  }
  func.func @transform_4(%arg0: i32) -> (i32, i32) {
    %c0_i32 = arith.constant 0 : i32
    %c0_i32_0 = arith.constant 0 : i32
    %c0_i32_1 = arith.constant 0 : i32
    return %c0_i32, %c0_i32_0 : i32, i32
  }
  func.func @transform_5(%arg0: i32) -> (i32, i32, i32) {
    %c0_i32 = arith.constant 0 : i32
    %c0_i32_0 = arith.constant 0 : i32
    %c0_i32_1 = arith.constant 0 : i32
    %c0_i32_2 = arith.constant 0 : i32
    return %c0_i32, %c0_i32_0, %c0_i32_1 : i32, i32, i32
  }
  func.func @transform_6(%arg0: i32) -> (i32, i32) {
    %c0_i32 = arith.constant 0 : i32
    %c0_i32_0 = arith.constant 0 : i32
    %c0_i32_1 = arith.constant 0 : i32
    return %c0_i32, %c0_i32_0 : i32, i32
  }
  func.func @transform_7(%arg0: i32) -> (i32, i32) {
    %c0_i32 = arith.constant 0 : i32
    %c0_i32_0 = arith.constant 0 : i32
    %c0_i32_1 = arith.constant 0 : i32
    return %c0_i32, %c0_i32_0 : i32, i32
  }
  func.func @transform_8(%arg0: i32) -> (i32, i32, i32) {
    %c0_i32 = arith.constant 0 : i32
    %c0_i32_0 = arith.constant 0 : i32
    %c0_i32_1 = arith.constant 0 : i32
    return %arg0, %c0_i32, %c0_i32_0 : i32, i32, i32
  }
}

</mosaic_0001>

<llo_original>
// kernel: squeeze.0
$region0: #{squeeze.0}
  %s0 = inlined_call_operand.vmem [shape: bf16[16,5,5], index: 0, kind: input, shape index: {}]
  %s1 = inlined_call_operand.vmem [shape: bf16[16,25], index: 1, kind: output, shape index: {}]
  $region1: #{squeeze.0} parent=0
    #allocation0 [shape = 'u8[16384]{0}', space=vmem, size = 0x4000, scoped, tag = 'scoped mem for output reshape']
    #allocation1 [shape = 'u8[20480]{0}', space=vmem, size = 0x5000, scoped, tag = 'scoped mem for input reshape']
    %s3 = smul.u32 4, 2
    %s4 = sshllo.u32 0, %s3
    %s5 = smul.addr 4, 4
    %s6 = scalar_lea.vmem %s0, %s5
    %s7 = sshrl.u32 %s4, 1
    %s8 = sor.u32 %s4, %s7
    %s9 = sand.u32 %s8, 85
    %s10 = sshrl.u32 %s9, 1
    %s11 = sor.u32 %s9, %s10
    %s12 = sand.u32 51, %s11
    %s13 = sshrl.u32 %s12, 2
    %s14 = sor.u32 %s12, %s13
    %s15 = sand.u32 15, %s14
    %v16 = vld [vmem:[%s6] sm:%s15]
    %v17 = vunpack.c.l.bf16 %v16
    %v18 = vunpack.c.h.bf16 %v16
    %s19 = scalar_lea.vmem [#allocation1], 32
    %20 = vst [vmem:[%s19] sm:%s4] %v17
    %s21 = smul.addr 4, 3
    %s22 = scalar_lea.vmem %s0, %s21
    %s23 = sshrl.u32 %s4, 1
    %s24 = sor.u32 %s4, %s23
    %s25 = sand.u32 %s24, 85
    %s26 = sshrl.u32 %s25, 1
    %s27 = sor.u32 %s25, %s26
    %s28 = sand.u32 51, %s27
    %s29 = sshrl.u32 %s28, 2
    %s30 = sor.u32 %s28, %s29
    %s31 = sand.u32 15, %s30
    %v32 = vld [vmem:[%s22] sm:%s31]
    %v33 = vunpack.c.l.bf16 %v32
    %v34 = vunpack.c.h.bf16 %v32
    %s35 = scalar_lea.vmem [#allocation1], 24
    %36 = vst [vmem:[%s35] sm:%s4] %v33
    %s37 = smul.addr 4, 2
    %s38 = scalar_lea.vmem %s0, %s37
    %s39 = sshrl.u32 %s4, 1
    %s40 = sor.u32 %s4, %s39
    %s41 = sand.u32 %s40, 85
    %s42 = sshrl.u32 %s41, 1
    %s43 = sor.u32 %s41, %s42
    %s44 = sand.u32 51, %s43
    %s45 = sshrl.u32 %s44, 2
    %s46 = sor.u32 %s44, %s45
    %s47 = sand.u32 15, %s46
    %v48 = vld [vmem:[%s38] sm:%s47]
    %v49 = vunpack.c.l.bf16 %v48
    %v50 = vunpack.c.h.bf16 %v48
    %s51 = scalar_lea.vmem [#allocation1], 16
    %52 = vst [vmem:[%s51] sm:%s4] %v49
    %s53 = scalar_lea.vmem %s0, 4
    %s54 = sshrl.u32 %s4, 1
    %s55 = sor.u32 %s4, %s54
    %s56 = sand.u32 %s55, 85
    %s57 = sshrl.u32 %s56, 1
    %s58 = sor.u32 %s56, %s57
    %s59 = sand.u32 51, %s58
    %s60 = sshrl.u32 %s59, 2
    %s61 = sor.u32 %s59, %s60
    %s62 = sand.u32 15, %s61
    %v63 = vld [vmem:[%s53] sm:%s62]
    %v64 = vunpack.c.l.bf16 %v63
    %v65 = vunpack.c.h.bf16 %v63
    %s66 = scalar_lea.vmem [#allocation1], 8
    %67 = vst [vmem:[%s66] sm:%s4] %v64
    %s68 = sshrl.u32 %s4, 1
    %s69 = sor.u32 %s4, %s68
    %s70 = sand.u32 %s69, 85
    %s71 = sshrl.u32 %s70, 1
    %s72 = sor.u32 %s70, %s71
    %s73 = sand.u32 51, %s72
    %s74 = sshrl.u32 %s73, 2
    %s75 = sor.u32 %s73, %s74
    %s76 = sand.u32 15, %s75
    %v77 = vld [vmem:[%s0] sm:%s76]
    %v78 = vunpack.c.l.bf16 %v77
    %v79 = vunpack.c.h.bf16 %v77
    %80 = vst [vmem:[#allocation1] sm:%s4] %v78
    %v81 = vld [vmem:[#allocation1] sm:$0x1f]
    %vm82 = vcmask 130048
    %83 = vst.msk [vmem:[#allocation0] sm:$0x1f] %vm82, %v81
    %s84 = scalar_lea.vmem [#allocation1], 8
    %v85 = vld [vmem:[%s84] sm:$0x1f]
    %vm86 = vcmask 130048
    %s87 = scalar_lea.vmem [#allocation0], 5
    %88 = vst.msk [vmem:[%s87] sm:$0x1f] %vm86, %v85
    %s89 = scalar_lea.vmem [#allocation1], 16
    %v90 = vld [vmem:[%s89] sm:$0x1f]
    %vm91 = vcmask 130048
    %s92 = scalar_lea.vmem [#allocation0], 10
    %93 = vst.msk [vmem:[%s92] sm:$0x1f] %vm91, %v90
    %s94 = scalar_lea.vmem [#allocation1], 24
    %v95 = vld [vmem:[%s94] sm:$0x1f]
    %vm96 = vcmask 130048
    %s97 = scalar_lea.vmem [#allocation0], 15
    %98 = vst.msk [vmem:[%s97] sm:$0x1f] %vm96, %v95
    %s99 = scalar_lea.vmem [#allocation1], 32
    %v100 = vld [vmem:[%s99] sm:$0x1f]
    %vm101 = vcmask 130048
    %s102 = scalar_lea.vmem [#allocation0], 20
    %103 = vst.msk [vmem:[%s102] sm:$0x1f] %vm101, %v100
    %s105 = smul.u32 4, 2
    %s106 = sshllo.u32 0, %s105
    %s107 = sshrl.u32 %s105, 1
    %v108 = vld [vmem:[#allocation0] sm:%s106]
    %v109 = vpack.c.bf16 0.0, %v108
    %s110 = sshllo.u32 0, %s107
    %111 = vst [vmem:[%s1] sm:%s110] %v109
    %s112 = scalar_lea.vmem [#allocation0], 8
    %v113 = vld [vmem:[%s112] sm:%s106]
    %v114 = vpack.c.bf16 0.0, %v113
    %s115 = sshllo.u32 0, %s107
    %s116 = scalar_lea.vmem %s1, 4
    %117 = vst [vmem:[%s116] sm:%s115] %v114
    %s118 = scalar_lea.vmem [#allocation0], 16
    %v119 = vld [vmem:[%s118] sm:%s106]
    %v120 = vpack.c.bf16 0.0, %v119
    %s121 = sshllo.u32 0, %s107
    %s122 = smul.addr 4, 2
    %s123 = scalar_lea.vmem %s1, %s122
    %124 = vst [vmem:[%s123] sm:%s121] %v120
    %s125 = scalar_lea.vmem [#allocation0], 24
    %v126 = vld [vmem:[%s125] sm:%s106]
    %v127 = vpack.c.bf16 0.0, %v126
    %s128 = sshllo.u32 0, %s107
    %s129 = smul.addr 4, 3
    %s130 = scalar_lea.vmem %s1, %s129
    %131 = vst [vmem:[%s130] sm:%s128] %v127

// kernel: convnet_forward.1
$region0: #{convnet_forward.1}
  #allocation0 [shape = 'u32[]', space=smem, size = 0x4, offset = 0x4, fixed_abs, tag = 'smem constant byte address 0x4 - core index']
  #allocation1 [shape = 'u32[144,128]{1,0:T(1,128)}', space=vmem, size = 0x12000, scoped, tag = 'internal scratch']
  %s0 = inlined_call_operand.vmem [shape: bf16[2,26,2048], index: 0, kind: input, shape index: {}]
  %s1 = inlined_call_operand.vmem [shape: bf16[16,26], index: 1, kind: input, shape index: {}]
  %s2 = inlined_call_operand.vmem [shape: bf16[32,400], index: 2, kind: input, shape index: {}]
  %s3 = inlined_call_operand.vmem [shape: f32[32,1], index: 3, kind: input, shape index: {}]
  %s4 = inlined_call_operand.vmem [shape: f32[324,256], index: 4, kind: input, shape index: {}]
  %s5 = inlined_call_operand.vmem [shape: f32[4,32,49], index: 5, kind: input, shape index: {}]
  %s6 = inlined_call_operand.vmem [shape: f32[1,128], index: 6, kind: input, shape index: {}]
  %s7 = inlined_call_operand.vmem [shape: f32[4,128], index: 7, kind: input, shape index: {}]
  %s8 = inlined_call_operand.hbm [shape: f32[2,1,128], index: 8, kind: output, shape index: {}]
  %s9 = sld [smem:[#allocation0]]
  $region65: #{convnet_forward.1} parent=0
    _
  %s11 = ssub.s32 1, %s9
  %s12 = scalar_select 0, %s11, %s9
  $region1: #{convnet_forward.1} parent=0
    #allocation2 [shape = 'u8[1024]{0}', space=vmem, size = 0x400, scoped, tag = 'output window, operand 0']
    #allocation3 [shape = 's32[2]{0}', space=sflag, size = 0x8, scoped, tag = 'scoped memory for convnet_forward.1']
    %13 = vsyncpa [#allocation3], 0
    %s14 = scalar_lea.sflag [#allocation3], 1
    %15 = vsyncpa %s14, 0
    loop: start=0, step=1, limit=4
    $region2: #{convnet_forward.1} parent=1 // loop_pre_header
      _
    $region3: #{convnet_forward.1} parent=1 // loop_header
      %s17 = sphi 0, %s21
      %p18 = scmp.ge.s32.totalorder %s17, 4
      %s27 = sphi 0, %s29
      %s30 = sphi 0, %s27
      %s31 = sphi 0, %s30
      %s47 = sphi 0, %s31
      %s51 = sphi 0, %s51
      %s53 = sphi 0, %s51
      %s54 = sphi 0, %s53
      %s68 = sphi 0, %s54
      %s72 = sphi 0, %s72
      %s74 = sphi 0, %s72
      %s75 = sphi 0, %s74
      %s89 = sphi 0, %s75
      %s93 = sphi 0, %s93
      %s95 = sphi 0, %s93
      %s96 = sphi 0, %s95
      %s110 = sphi 0, %s96
      %s114 = sphi 0, %s114
      %s116 = sphi 0, %s114
      %s117 = sphi 0, %s116
      %s131 = sphi 0, %s117
      %s135 = sphi 0, %s135
      %s137 = sphi 0, %s135
      %s138 = sphi 0, %s137
      %s152 = sphi 0, %s138
      %s156 = sphi 0, %s156
      %s158 = sphi 0, %s156
      %s159 = sphi 0, %s158
      %s173 = sphi 0, %s159
      %s177 = sphi 0, %s177
      %s179 = sphi 0, %s177
      %s180 = sphi 0, %s179
      %s194 = sphi 0, %s180
      %s200 = sphi 0, %s202
      %s203 = sphi 0, %s200
      %s204 = sphi 0, %s203
      %s220 = sphi 0, %s204
    $region4: #{convnet_forward.1} parent=1 // loop_header_branch
      %20 = sbr.rel (%p18) target = $region8
    $region5: #{convnet_forward.1} parent=1 // loop_body
      %s22 = ssub.s32 %s17, 1
      %s23 = ssub.s32 %s17, 2
      %s24 = sadd.s32 %s17, 1
      %s25 = ssub.s32 %s17, %s24
      %p26 = scmp.eq.s32.totalorder %s25, 0
      %s28 = sadd.s32 %s27, 1
      %s29 = scalar_select %p26, %s27, %s28
      %p32 = pneg %p26
      %p33 = scmp.eq.s32.totalorder %s17, 1
      %p34 = por %p32, %p33
      %p35 = scmp.ne.s32.totalorder %s27, %s30
      %p36 = scmp.eq.s32.totalorder %s17, 0
      %p37 = por %p35, %p36
      %p38 = scmp.ne.s32.totalorder %s27, %s30
      %p39 = scmp.eq.s32.totalorder %s22, 1
      %p40 = por %p38, %p39
      %p41 = scmp.ne.s32.totalorder %s30, %s31
      %p42 = scmp.eq.s32.totalorder %s22, 0
      %p43 = por %p41, %p42
      %p44 = scmp.ne.s32.totalorder %s30, %s31
      %p45 = scmp.eq.s32.totalorder %s23, 1
      %p46 = por %p44, %p45
      %p48 = scmp.ne.s32.totalorder %s31, %s47
      %p49 = scmp.eq.s32.totalorder %s23, 0
      %p50 = por %p48, %p49
      %s52 = sadd.s32 %s51, 1
      %p55 = scmp.eq.s32.totalorder %s17, 1
      %p56 = scmp.ne.s32.totalorder %s51, %s53
      %p57 = scmp.eq.s32.totalorder %s17, 0
      %p58 = por %p56, %p57
      %p59 = scmp.ne.s32.totalorder %s51, %s53
      %p60 = scmp.eq.s32.totalorder %s22, 1
      %p61 = por %p59, %p60
      %p62 = scmp.ne.s32.totalorder %s53, %s54
      %p63 = scmp.eq.s32.totalorder %s22, 0
      %p64 = por %p62, %p63
      %p65 = scmp.ne.s32.totalorder %s53, %s54
      %p66 = scmp.eq.s32.totalorder %s23, 1
      %p67 = por %p65, %p66
      %p69 = scmp.ne.s32.totalorder %s54, %s68
      %p70 = scmp.eq.s32.totalorder %s23, 0
      %p71 = por %p69, %p70
      %s73 = sadd.s32 %s72, 1
      %p76 = scmp.eq.s32.totalorder %s17, 1
      %p77 = scmp.ne.s32.totalorder %s72, %s74
      %p78 = scmp.eq.s32.totalorder %s17, 0
      %p79 = por %p77, %p78
      %p80 = scmp.ne.s32.totalorder %s72, %s74
      %p81 = scmp.eq.s32.totalorder %s22, 1
      %p82 = por %p80, %p81
      %p83 = scmp.ne.s32.totalorder %s74, %s75
      %p84 = scmp.eq.s32.totalorder %s22, 0
      %p85 = por %p83, %p84
      %p86 = scmp.ne.s32.totalorder %s74, %s75
      %p87 = scmp.eq.s32.totalorder %s23, 1
      %p88 = por %p86, %p87
      %p90 = scmp.ne.s32.totalorder %s75, %s89
      %p91 = scmp.eq.s32.totalorder %s23, 0
      %p92 = por %p90, %p91
      %s94 = sadd.s32 %s93, 1
      %p97 = scmp.eq.s32.totalorder %s17, 1
      %p98 = scmp.ne.s32.totalorder %s93, %s95
      %p99 = scmp.eq.s32.totalorder %s17, 0
      %p100 = por %p98, %p99
      %p101 = scmp.ne.s32.totalorder %s93, %s95
      %p102 = scmp.eq.s32.totalorder %s22, 1
      %p103 = por %p101, %p102
      %p104 = scmp.ne.s32.totalorder %s95, %s96
      %p105 = scmp.eq.s32.totalorder %s22, 0
      %p106 = por %p104, %p105
      %p107 = scmp.ne.s32.totalorder %s95, %s96
      %p108 = scmp.eq.s32.totalorder %s23, 1
      %p109 = por %p107, %p108
      %p111 = scmp.ne.s32.totalorder %s96, %s110
      %p112 = scmp.eq.s32.totalorder %s23, 0
      %p113 = por %p111, %p112
      %s115 = sadd.s32 %s114, 1
      %p118 = scmp.eq.s32.totalorder %s17, 1
      %p119 = scmp.ne.s32.totalorder %s114, %s116
      %p120 = scmp.eq.s32.totalorder %s17, 0
      %p121 = por %p119, %p120
      %p122 = scmp.ne.s32.totalorder %s114, %s116
      %p123 = scmp.eq.s32.totalorder %s22, 1
      %p124 = por %p122, %p123
      %p125 = scmp.ne.s32.totalorder %s116, %s117
      %p126 = scmp.eq.s32.totalorder %s22, 0
      %p127 = por %p125, %p126
      %p128 = scmp.ne.s32.totalorder %s116, %s117
      %p129 = scmp.eq.s32.totalorder %s23, 1
      %p130 = por %p128, %p129
      %p132 = scmp.ne.s32.totalorder %s117, %s131
      %p133 = scmp.eq.s32.totalorder %s23, 0
      %p134 = por %p132, %p133
      %s136 = sadd.s32 %s135, 1
      %p139 = scmp.eq.s32.totalorder %s17, 1
      %p140 = scmp.ne.s32.totalorder %s135, %s137
      %p141 = scmp.eq.s32.totalorder %s17, 0
      %p142 = por %p140, %p141
      %p143 = scmp.ne.s32.totalorder %s135, %s137
      %p144 = scmp.eq.s32.totalorder %s22, 1
      %p145 = por %p143, %p144
      %p146 = scmp.ne.s32.totalorder %s137, %s138
      %p147 = scmp.eq.s32.totalorder %s22, 0
      %p148 = por %p146, %p147
      %p149 = scmp.ne.s32.totalorder %s137, %s138
      %p150 = scmp.eq.s32.totalorder %s23, 1
      %p151 = por %p149, %p150
      %p153 = scmp.ne.s32.totalorder %s138, %s152
      %p154 = scmp.eq.s32.totalorder %s23, 0
      %p155 = por %p153, %p154
      %s157 = sadd.s32 %s156, 1
      %p160 = scmp.eq.s32.totalorder %s17, 1
      %p161 = scmp.ne.s32.totalorder %s156, %s158
      %p162 = scmp.eq.s32.totalorder %s17, 0
      %p163 = por %p161, %p162
      %p164 = scmp.ne.s32.totalorder %s156, %s158
      %p165 = scmp.eq.s32.totalorder %s22, 1
      %p166 = por %p164, %p165
      %p167 = scmp.ne.s32.totalorder %s158, %s159
      %p168 = scmp.eq.s32.totalorder %s22, 0
      %p169 = por %p167, %p168
      %p170 = scmp.ne.s32.totalorder %s158, %s159
      %p171 = scmp.eq.s32.totalorder %s23, 1
      %p172 = por %p170, %p171
      %p174 = scmp.ne.s32.totalorder %s159, %s173
      %p175 = scmp.eq.s32.totalorder %s23, 0
      %p176 = por %p174, %p175
      %s178 = sadd.s32 %s177, 1
      %p181 = scmp.eq.s32.totalorder %s17, 1
      %p182 = scmp.ne.s32.totalorder %s177, %s179
      %p183 = scmp.eq.s32.totalorder %s17, 0
      %p184 = por %p182, %p183
      %p185 = scmp.ne.s32.totalorder %s177, %s179
      %p186 = scmp.eq.s32.totalorder %s22, 1
      %p187 = por %p185, %p186
      %p188 = scmp.ne.s32.totalorder %s179, %s180
      %p189 = scmp.eq.s32.totalorder %s22, 0
      %p190 = por %p188, %p189
      %p191 = scmp.ne.s32.totalorder %s179, %s180
      %p192 = scmp.eq.s32.totalorder %s23, 1
      %p193 = por %p191, %p192
      %p195 = scmp.ne.s32.totalorder %s180, %s194
      %p196 = scmp.eq.s32.totalorder %s23, 0
      %p197 = por %p195, %p196
      %s198 = ssub.s32 %s17, %s24
      %p199 = scmp.eq.s32.totalorder %s198, 0
      %s201 = sadd.s32 %s200, 1
      %s202 = scalar_select %p199, %s200, %s201
      %p205 = pneg %p199
      %p206 = scmp.eq.s32.totalorder %s17, 1
      %p207 = por %p205, %p206
      %p208 = scmp.ne.s32.totalorder %s200, %s203
      %p209 = scmp.eq.s32.totalorder %s17, 0
      %p210 = por %p208, %p209
      %p211 = scmp.ne.s32.totalorder %s200, %s203
      %p212 = scmp.eq.s32.totalorder %s22, 1
      %p213 = por %p211, %p212
      %p214 = scmp.ne.s32.totalorder %s203, %s204
      %p215 = scmp.eq.s32.totalorder %s22, 0
      %p216 = por %p214, %p215
      %p217 = scmp.ne.s32.totalorder %s203, %s204
      %p218 = scmp.eq.s32.totalorder %s23, 1
      %p219 = por %p217, %p218
      %p221 = scmp.ne.s32.totalorder %s204, %s220
      %p222 = scmp.eq.s32.totalorder %s23, 0
      %p223 = por %p221, %p222
      %p224 = scmp.le.s32.totalorder 1, %s17
      %p225 = scmp.lt.s32.totalorder %s17, 3
      %p226 = pnand %p224, %p225
      %p227 = pneg %p226
      // Predicated region
      $region9: #{convnet_forward.1} parent=5 // pred_check
        _
      $region10: #{convnet_forward.1} parent=5 // pred_check_branch
        %229 = sbr.rel (%p226) target = $region12
      $region11: #{convnet_forward.1} parent=5 // pred_region
        %s230 = ssub.s32 %s17, 1
        // Predicated region
        $region13: #{convnet_forward.1} parent=11 // pred_check
          %p231 = pneg %p64
        $region14: #{convnet_forward.1} parent=11 // pred_check_branch
          %233 = sbr.rel (%p231) target = $region16
        $region15: #{convnet_forward.1} parent=11 // pred_region
          _
        $region16: #{convnet_forward.1} parent=11 // pred_fallthru
          _
        // Predicated region
        $region17: #{convnet_forward.1} parent=11 // pred_check
          %p234 = pneg %p85
        $region18: #{convnet_forward.1} parent=11 // pred_check_branch
          %236 = sbr.rel (%p234) target = $region20
        $region19: #{convnet_forward.1} parent=11 // pred_region
          _
        $region20: #{convnet_forward.1} parent=11 // pred_fallthru
          _
        // Predicated region
        $region21: #{convnet_forward.1} parent=11 // pred_check
          %p237 = pneg %p106
        $region22: #{convnet_forward.1} parent=11 // pred_check_branch
          %239 = sbr.rel (%p237) target = $region24
        $region23: #{convnet_forward.1} parent=11 // pred_region
          _
        $region24: #{convnet_forward.1} parent=11 // pred_fallthru
          _
        // Predicated region
        $region25: #{convnet_forward.1} parent=11 // pred_check
          %p240 = pneg %p127
        $region26: #{convnet_forward.1} parent=11 // pred_check_branch
          %242 = sbr.rel (%p240) target = $region28
        $region27: #{convnet_forward.1} parent=11 // pred_region
          _
        $region28: #{convnet_forward.1} parent=11 // pred_fallthru
          _
        // Predicated region
        $region29: #{convnet_forward.1} parent=11 // pred_check
          %p243 = pneg %p148
        $region30: #{convnet_forward.1} parent=11 // pred_check_branch
          %245 = sbr.rel (%p243) target = $region32
        $region31: #{convnet_forward.1} parent=11 // pred_region
          _
        $region32: #{convnet_forward.1} parent=11 // pred_fallthru
          _
        // Predicated region
        $region33: #{convnet_forward.1} parent=11 // pred_check
          %p246 = pneg %p169
        $region34: #{convnet_forward.1} parent=11 // pred_check_branch
          %248 = sbr.rel (%p246) target = $region36
        $region35: #{convnet_forward.1} parent=11 // pred_region
          _
        $region36: #{convnet_forward.1} parent=11 // pred_fallthru
          _
        // Predicated region
        $region37: #{convnet_forward.1} parent=11 // pred_check
          %p249 = pneg %p190
        $region38: #{convnet_forward.1} parent=11 // pred_check_branch
          %251 = sbr.rel (%p249) target = $region40
        $region39: #{convnet_forward.1} parent=11 // pred_region
          _
        $region40: #{convnet_forward.1} parent=11 // pred_fallthru
          _
      $region12: #{convnet_forward.1} parent=5 // pred_fallthru
        _
      %p252 = scmp.lt.s32.totalorder %s17, 2
      // Predicated region
      $region41: #{convnet_forward.1} parent=5 // pred_check
        %p253 = pneg %p252
      $region42: #{convnet_forward.1} parent=5 // pred_check_branch
        %255 = sbr.rel (%p253) target = $region44
      $region43: #{convnet_forward.1} parent=5 // pred_region
        // Predicated region
        $region45: #{convnet_forward.1} parent=43 // pred_check
          %p256 = pneg %p37
        $region46: #{convnet_forward.1} parent=43 // pred_check_branch
          %258 = sbr.rel (%p256) target = $region48
        $region47: #{convnet_forward.1} parent=43 // pred_region
          %p259 = scmp.lt.s32.totalorder %s17, 1
          %s260 = scalar_select %p259, %s17, 1
          %s261 = smul.addr %s260, 64
          %s262 = smul.addr %s261, 4
          %s263 = scalar_lea.vmem %s0, %s262
        $region48: #{convnet_forward.1} parent=43 // pred_fallthru
          _
      $region44: #{convnet_forward.1} parent=5 // pred_fallthru
        _
      %p264 = scmp.le.s32.totalorder 1, %s17
      %p265 = scmp.lt.s32.totalorder %s17, 3
      %p266 = pnand %p264, %p265
      %p267 = pneg %p266
      // Predicated region
      $region49: #{convnet_forward.1} parent=5 // pred_check
        _
      $region50: #{convnet_forward.1} parent=5 // pred_check_branch
        %269 = sbr.rel (%p266) target = $region52
      $region51: #{convnet_forward.1} parent=5 // pred_region
        %s270 = ssub.s32 %s17, 1
        %p271 = scmp.lt.s32.totalorder %s22, 1
        %s272 = scalar_select %p271, %s22, 1
        %s273 = smul.addr %s272, 64
        %s274 = smul.addr %s273, 4
        %s275 = scalar_lea.vmem %s0, %s274
        %p276 = pneg %p43
        %p277 = pneg %p40
        %p278 = pneg %p64
        %p279 = pneg %p61
        %p280 = pneg %p85
        %p281 = pneg %p82
        %p282 = pneg %p106
        %p283 = pneg %p103
        %p284 = pneg %p127
        %p285 = pneg %p124
        %p286 = pneg %p148
        %p287 = pneg %p145
        %p288 = pneg %p169
        %p289 = pneg %p166
        %p290 = pneg %p190
        %p291 = pneg %p187
        %p292 = pneg %p216
        %p293 = pneg %p213
        %s294 = sand.u32 %s203, 1
        %s295 = scalar_lea.sflag [#allocation3], %s294
        %s296 = sand.u32 %s203, 1
        %s297 = scalar_lea.vmem [#allocation2], %s296
        %p298 = scmp.lt.s32.totalorder %s22, 1
        %s299 = scalar_select %p298, %s22, 1
        %s300 = smul.addr %s299, 64
        %s301 = smul.addr %s300, 4
        %s302 = scalar_lea.vmem %s0, %s301
        %v304 = vld [vmem:[%s1] sm:$0xf]
        %v305 = vld [vmem:[%s1 + $0x4] sm:$0xf]
        %v306 = vld [vmem:[%s302] sm:$0xff]
        %v307 = vld [vmem:[%s302 + $0x8] sm:$0xff]
        %v308 = vld [vmem:[%s302 + $0x10] sm:$0xff]
        %v309 = vld [vmem:[%s302 + $0x18] sm:$0xff]
        %v310 = vld [vmem:[%s302 + $0x20] sm:$0xff]
        %v311 = vld [vmem:[%s302 + $0x28] sm:$0xff]
        %v312 = vld [vmem:[%s302 + $0x30] sm:$0xff]
        %v313 = vld [vmem:[%s302 + $0x38] sm:$0xff]
        %v314 = vld [vmem:[%s302 + $0x40] sm:$0xff]
        %v315 = vld [vmem:[%s302 + $0x48] sm:$0xff]
        %v316 = vld [vmem:[%s302 + $0x50] sm:$0xff]
        %v317 = vld [vmem:[%s302 + $0x58] sm:$0xff]
        %v318 = vld [vmem:[%s302 + $0x60] sm:$0xff]
        %v319 = vld [vmem:[%s302 + $0x68] sm:$0xff]
        %v320 = vld [vmem:[%s302 + $0x70] sm:$0xff]
        %v321 = vld [vmem:[%s302 + $0x78] sm:$0xff]
        %v322 = vld [vmem:[%s302 + $0x80] sm:$0xff]
        %v323 = vld [vmem:[%s302 + $0x88] sm:$0xff]
        %v324 = vld [vmem:[%s302 + $0x90] sm:$0xff]
        %v325 = vld [vmem:[%s302 + $0x98] sm:$0xff]
        %v326 = vld [vmem:[%s302 + $0xa0] sm:$0xff]
        %v327 = vld [vmem:[%s302 + $0xa8] sm:$0xff]
        %v328 = vld [vmem:[%s302 + $0xb0] sm:$0xff]
        %v329 = vld [vmem:[%s302 + $0xb8] sm:$0xff]
        %v330 = vld [vmem:[%s302 + $0xc0] sm:$0x11]
        %v331 = vld [vmem:[%s302 + $0xc8] sm:$0x11]
        %v332 = vld [vmem:[%s302 + $0xd0] sm:$0x11]
        %v333 = vld [vmem:[%s302 + $0xd8] sm:$0x11]
        %v334 = vld [vmem:[%s302 + $0xe0] sm:$0x11]
        %v335 = vld [vmem:[%s302 + $0xe8] sm:$0x11]
        %v336 = vld [vmem:[%s302 + $0xf0] sm:$0x11]
        %v337 = vld [vmem:[%s302 + $0xf8] sm:$0x11]
        %v340 = vunpack.c.l.b16 %v304
        %v341 = vunpack.c.l.b16 %v305
        %v342 = vpack.c.b16 %v341, %v340
        %v375 = vunpack.c.l.b16 %v306
        %v376 = vunpack.c.h.b16 %v306
        %v377 = vunpack.c.l.b16 %v307
        %v378 = vunpack.c.h.b16 %v307
        %v379 = vunpack.c.l.b16 %v308
        %v380 = vunpack.c.h.b16 %v308
        %v381 = vunpack.c.l.b16 %v309
        %v382 = vunpack.c.h.b16 %v309
        %v383 = vunpack.c.l.b16 %v310
        %v384 = vunpack.c.h.b16 %v310
        %v385 = vunpack.c.l.b16 %v311
        %v386 = vunpack.c.h.b16 %v311
        %v387 = vunpack.c.l.b16 %v312
        %v388 = vunpack.c.h.b16 %v312
        %v389 = vunpack.c.l.b16 %v313
        %v390 = vunpack.c.h.b16 %v313
        %v391 = vunpack.c.l.b16 %v314
        %v392 = vunpack.c.h.b16 %v314
        %v393 = vunpack.c.l.b16 %v315
        %v394 = vunpack.c.h.b16 %v315
        %v395 = vunpack.c.l.b16 %v316
        %v396 = vunpack.c.h.b16 %v316
        %v397 = vunpack.c.l.b16 %v317
        %v398 = vunpack.c.h.b16 %v317
        %v399 = vunpack.c.l.b16 %v318
        %v400 = vunpack.c.h.b16 %v318
        %v401 = vunpack.c.l.b16 %v319
        %v402 = vunpack.c.h.b16 %v319
        %v403 = vunpack.c.l.b16 %v320
        %v404 = vunpack.c.h.b16 %v320
        %v405 = vunpack.c.l.b16 %v321
        %v406 = vunpack.c.h.b16 %v321
        %v407 = vunpack.c.l.b16 %v322
        %v408 = vunpack.c.h.b16 %v322
        %v409 = vunpack.c.l.b16 %v323
        %v410 = vunpack.c.h.b16 %v323
        %v411 = vunpack.c.l.b16 %v324
        %v412 = vunpack.c.h.b16 %v324
        %v413 = vunpack.c.l.b16 %v325
        %v414 = vunpack.c.h.b16 %v325
        %v415 = vunpack.c.l.b16 %v326
        %v416 = vunpack.c.h.b16 %v326
        %v417 = vunpack.c.l.b16 %v327
        %v418 = vunpack.c.h.b16 %v327
        %v419 = vunpack.c.l.b16 %v328
        %v420 = vunpack.c.h.b16 %v328
        %v421 = vunpack.c.l.b16 %v329
        %v422 = vunpack.c.h.b16 %v329
        %v423 = vunpack.c.l.b16 %v330
        %v424 = vunpack.c.h.b16 %v330
        %v425 = vunpack.c.l.b16 %v331
        %v426 = vunpack.c.h.b16 %v331
        %v427 = vunpack.c.l.b16 %v332
        %v428 = vunpack.c.h.b16 %v332
        %v429 = vunpack.c.l.b16 %v333
        %v430 = vunpack.c.h.b16 %v333
        %v431 = vunpack.c.l.b16 %v334
        %v432 = vunpack.c.h.b16 %v334
        %v433 = vunpack.c.l.b16 %v335
        %v434 = vunpack.c.h.b16 %v335
        %v435 = vunpack.c.l.b16 %v336
        %v436 = vunpack.c.h.b16 %v336
        %v437 = vunpack.c.l.b16 %v337
        %v438 = vunpack.c.h.b16 %v337
        %v439 = vpack.c.b16 %v391, %v375
        %v440 = vpack.c.b16 %v392, %v376
        %v441 = vpack.c.b16 %v393, %v377
        %v442 = vpack.c.b16 %v394, %v378
        %v443 = vpack.c.b16 %v395, %v379
        %v444 = vpack.c.b16 %v396, %v380
        %v445 = vpack.c.b16 %v397, %v381
        %v446 = vpack.c.b16 %v398, %v382
        %v447 = vpack.c.b16 %v399, %v383
        %v448 = vpack.c.b16 %v400, %v384
        %v449 = vpack.c.b16 %v401, %v385
        %v450 = vpack.c.b16 %v402, %v386
        %v451 = vpack.c.b16 %v403, %v387
        %v452 = vpack.c.b16 %v404, %v388
        %v453 = vpack.c.b16 %v405, %v389
        %v454 = vpack.c.b16 %v406, %v390
        %v455 = vpack.c.b16 %v423, %v407
        %v456 = vpack.c.b16 %v424, %v408
        %v457 = vpack.c.b16 %v425, %v409
        %v458 = vpack.c.b16 %v426, %v410
        %v459 = vpack.c.b16 %v427, %v411
        %v460 = vpack.c.b16 %v428, %v412
        %v461 = vpack.c.b16 %v429, %v413
        %v462 = vpack.c.b16 %v430, %v414
        %v463 = vpack.c.b16 %v431, %v415
        %v464 = vpack.c.b16 %v432, %v416
        %v465 = vpack.c.b16 %v433, %v417
        %v466 = vpack.c.b16 %v434, %v418
        %v467 = vpack.c.b16 %v435, %v419
        %v468 = vpack.c.b16 %v436, %v420
        %v469 = vpack.c.b16 %v437, %v421
        %v470 = vpack.c.b16 %v438, %v422
        %vm487 = vcmask 211968
        %v489 = vsel %vm487, %v342, 0
        %vm491 = vcmask 1044480
        %v493 = vsel %vm491, %v455, 0
        %v496 = vsel %vm491, %v456, 0
        %v499 = vsel %vm491, %v457, 0
        %v502 = vsel %vm491, %v458, 0
        %v505 = vsel %vm491, %v459, 0
        %v508 = vsel %vm491, %v460, 0
        %v511 = vsel %vm491, %v461, 0
        %v514 = vsel %vm491, %v462, 0
        %v517 = vsel %vm491, %v463, 0
        %v520 = vsel %vm491, %v464, 0
        %v523 = vsel %vm491, %v465, 0
        %v526 = vsel %vm491, %v466, 0
        %v529 = vsel %vm491, %v467, 0
        %v532 = vsel %vm491, %v468, 0
        %v535 = vsel %vm491, %v469, 0
        %v538 = vsel %vm491, %v470, 0
        %540 = vmatprep.subr.bf16.mxu0 %v440
        %541 = vmatpush1.bf16.msra.mxu0 %v439
        %542 = vmatprep.subr.bf16.mxu0 %v496
        %543 = vmatpush1.bf16.msra.mxu0 %v493
        %544 = vmatprep.subr.bf16.mxu0 0
        %545 = vmatpush1.bf16.msra.mxu0 0
        %546 = vmatprep.subr.bf16.mxu0 0
        %547 = vmatpush1.bf16.msra.mxu0 0
        %548 = vmatprep.subr.bf16.mxu0 0
        %549 = vmatpush1.bf16.msra.mxu0 0
        %550 = vmatprep.subr.bf16.mxu0 0
        %551 = vmatpush1.bf16.msra.mxu0 0
        %552 = vmatprep.subr.bf16.mxu0 0
        %553 = vmatpush1.bf16.msra.mxu0 0
        %554 = vmatprep.subr.bf16.mxu0 0
        %555 = vmatpush1.bf16.msra.mxu0 0
        %556 = vmatprep.subr.bf16.mxu0 0
        %557 = vmatpush1.bf16.msra.mxu0 0
        %558 = vmatprep.subr.bf16.mxu0 0
        %559 = vmatpush1.bf16.msra.mxu0 0
        %560 = vmatprep.subr.bf16.mxu0 0
        %561 = vmatpush1.bf16.msra.mxu0 0
        %562 = vmatprep.subr.bf16.mxu0 0
        %563 = vmatpush1.bf16.msra.mxu0 0
        %564 = vmatprep.subr.bf16.mxu0 0
        %565 = vmatpush1.bf16.msra.mxu0 0
        %566 = vmatprep.subr.bf16.mxu0 0
        %567 = vmatpush1.bf16.msra.mxu0 0
        %568 = vmatprep.subr.bf16.mxu0 0
        %569 = vmatpush1.bf16.msra.mxu0 0
        %570 = vmatprep.subr.bf16.mxu0 0
        %571 = vmatpush1.bf16.msra.mxu0 0
        %572 = vmatprep.mubr.bf16.mxu0 0
        %573 = vmatmul.mubr.bf16.gmra.mrb[0].mxu0 %v489
        %v574 = vpop.f32.mrb[0].mxu0
        %v575 = vadd.f32 0.0, %v574
        %v576 = vpop.f32.mrb[0].mxu0
        %v577 = vadd.f32 0.0, %v576
        %v578 = vpop.f32.mrb[0].mxu0
        %v579 = vadd.f32 0.0, %v578
        %v580 = vpop.f32.mrb[0].mxu0
        %v581 = vadd.f32 0.0, %v580
        %582 = vdwg.mxu0
        %583 = vmatprep.subr.bf16.mxu0 %v442
        %584 = vmatpush1.bf16.msra.mxu0 %v441
        %585 = vmatprep.subr.bf16.mxu0 %v502
        %586 = vmatpush1.bf16.msra.mxu0 %v499
        %587 = vmatprep.subr.bf16.mxu0 0
        %588 = vmatpush1.bf16.msra.mxu0 0
        %589 = vmatprep.subr.bf16.mxu0 0
        %590 = vmatpush1.bf16.msra.mxu0 0
        %591 = vmatprep.subr.bf16.mxu0 0
        %592 = vmatpush1.bf16.msra.mxu0 0
        %593 = vmatprep.subr.bf16.mxu0 0
        %594 = vmatpush1.bf16.msra.mxu0 0
        %595 = vmatprep.subr.bf16.mxu0 0
        %596 = vmatpush1.bf16.msra.mxu0 0
        %597 = vmatprep.subr.bf16.mxu0 0
        %598 = vmatpush1.bf16.msra.mxu0 0
        %599 = vmatprep.subr.bf16.mxu0 0
        %600 = vmatpush1.bf16.msra.mxu0 0
        %601 = vmatprep.subr.bf16.mxu0 0
        %602 = vmatpush1.bf16.msra.mxu0 0
        %603 = vmatprep.subr.bf16.mxu0 0
        %604 = vmatpush1.bf16.msra.mxu0 0
        %605 = vmatprep.subr.bf16.mxu0 0
        %606 = vmatpush1.bf16.msra.mxu0 0
        %607 = vmatprep.subr.bf16.mxu0 0
        %608 = vmatpush1.bf16.msra.mxu0 0
        %609 = vmatprep.subr.bf16.mxu0 0
        %610 = vmatpush1.bf16.msra.mxu0 0
        %611 = vmatprep.subr.bf16.mxu0 0
        %612 = vmatpush1.bf16.msra.mxu0 0
        %613 = vmatprep.subr.bf16.mxu0 0
        %614 = vmatpush1.bf16.msra.mxu0 0
        %615 = vmatprep.mubr.bf16.mxu0 0
        %616 = vmatmul.mubr.bf16.gmra.mrb[0].mxu0 %v489
        %v617 = vpop.f32.mrb[0].mxu0
        %v618 = vadd.f32 0.0, %v617
        %v619 = vpop.f32.mrb[0].mxu0
        %v620 = vadd.f32 0.0, %v619
        %v621 = vpop.f32.mrb[0].mxu0
        %v622 = vadd.f32 0.0, %v621
        %v623 = vpop.f32.mrb[0].mxu0
        %v624 = vadd.f32 0.0, %v623
        %625 = vdwg.mxu0
        %626 = vmatprep.subr.bf16.mxu0 %v444
        %627 = vmatpush1.bf16.msra.mxu0 %v443
        %628 = vmatprep.subr.bf16.mxu0 %v508
        %629 = vmatpush1.bf16.msra.mxu0 %v505
        %630 = vmatprep.subr.bf16.mxu0 0
        %631 = vmatpush1.bf16.msra.mxu0 0
        %632 = vmatprep.subr.bf16.mxu0 0
        %633 = vmatpush1.bf16.msra.mxu0 0
        %634 = vmatprep.subr.bf16.mxu0 0
        %635 = vmatpush1.bf16.msra.mxu0 0
        %636 = vmatprep.subr.bf16.mxu0 0
        %637 = vmatpush1.bf16.msra.mxu0 0
        %638 = vmatprep.subr.bf16.mxu0 0
        %639 = vmatpush1.bf16.msra.mxu0 0
        %640 = vmatprep.subr.bf16.mxu0 0
        %641 = vmatpush1.bf16.msra.mxu0 0
        %642 = vmatprep.subr.bf16.mxu0 0
        %643 = vmatpush1.bf16.msra.mxu0 0
        %644 = vmatprep.subr.bf16.mxu0 0
        %645 = vmatpush1.bf16.msra.mxu0 0
        %646 = vmatprep.subr.bf16.mxu0 0
        %647 = vmatpush1.bf16.msra.mxu0 0
        %648 = vmatprep.subr.bf16.mxu0 0
        %649 = vmatpush1.bf16.msra.mxu0 0
        %650 = vmatprep.subr.bf16.mxu0 0
        %651 = vmatpush1.bf16.msra.mxu0 0
        %652 = vmatprep.subr.bf16.mxu0 0
        %653 = vmatpush1.bf16.msra.mxu0 0
        %654 = vmatprep.subr.bf16.mxu0 0
        %655 = vmatpush1.bf16.msra.mxu0 0
        %656 = vmatprep.subr.bf16.mxu0 0
        %657 = vmatpush1.bf16.msra.mxu0 0
        %658 = vmatprep.mubr.bf16.mxu0 0
        %659 = vmatmul.mubr.bf16.gmra.mrb[0].mxu0 %v489
        %v660 = vpop.f32.mrb[0].mxu0
        %v661 = vadd.f32 0.0, %v660
        %v662 = vpop.f32.mrb[0].mxu0
        %v663 = vadd.f32 0.0, %v662
        %v664 = vpop.f32.mrb[0].mxu0
        %v665 = vadd.f32 0.0, %v664
        %v666 = vpop.f32.mrb[0].mxu0
        %v667 = vadd.f32 0.0, %v666
        %668 = vdwg.mxu0
        %669 = vmatprep.subr.bf16.mxu0 %v446
        %670 = vmatpush1.bf16.msra.mxu0 %v445
        %671 = vmatprep.subr.bf16.mxu0 %v514
        %672 = vmatpush1.bf16.msra.mxu0 %v511
        %673 = vmatprep.subr.bf16.mxu0 0
        %674 = vmatpush1.bf16.msra.mxu0 0
        %675 = vmatprep.subr.bf16.mxu0 0
        %676 = vmatpush1.bf16.msra.mxu0 0
        %677 = vmatprep.subr.bf16.mxu0 0
        %678 = vmatpush1.bf16.msra.mxu0 0
        %679 = vmatprep.subr.bf16.mxu0 0
        %680 = vmatpush1.bf16.msra.mxu0 0
        %681 = vmatprep.subr.bf16.mxu0 0
        %682 = vmatpush1.bf16.msra.mxu0 0
        %683 = vmatprep.subr.bf16.mxu0 0
        %684 = vmatpush1.bf16.msra.mxu0 0
        %685 = vmatprep.subr.bf16.mxu0 0
        %686 = vmatpush1.bf16.msra.mxu0 0
        %687 = vmatprep.subr.bf16.mxu0 0
        %688 = vmatpush1.bf16.msra.mxu0 0
        %689 = vmatprep.subr.bf16.mxu0 0
        %690 = vmatpush1.bf16.msra.mxu0 0
        %691 = vmatprep.subr.bf16.mxu0 0
        %692 = vmatpush1.bf16.msra.mxu0 0
        %693 = vmatprep.subr.bf16.mxu0 0
        %694 = vmatpush1.bf16.msra.mxu0 0
        %695 = vmatprep.subr.bf16.mxu0 0
        %696 = vmatpush1.bf16.msra.mxu0 0
        %697 = vmatprep.subr.bf16.mxu0 0
        %698 = vmatpush1.bf16.msra.mxu0 0
        %699 = vmatprep.subr.bf16.mxu0 0
        %700 = vmatpush1.bf16.msra.mxu0 0
        %701 = vmatprep.mubr.bf16.mxu0 0
        %702 = vmatmul.mubr.bf16.gmra.mrb[0].mxu0 %v489
        %v703 = vpop.f32.mrb[0].mxu0
        %v704 = vadd.f32 0.0, %v703
        %v705 = vpop.f32.mrb[0].mxu0
        %v706 = vadd.f32 0.0, %v705
        %v707 = vpop.f32.mrb[0].mxu0
        %v708 = vadd.f32 0.0, %v707
        %v709 = vpop.f32.mrb[0].mxu0
        %v710 = vadd.f32 0.0, %v709
        %711 = vdwg.mxu0
        %712 = vmatprep.subr.bf16.mxu0 %v448
        %713 = vmatpush1.bf16.msra.mxu0 %v447
        %714 = vmatprep.subr.bf16.mxu0 %v520
        %715 = vmatpush1.bf16.msra.mxu0 %v517
        %716 = vmatprep.subr.bf16.mxu0 0
        %717 = vmatpush1.bf16.msra.mxu0 0
        %718 = vmatprep.subr.bf16.mxu0 0
        %719 = vmatpush1.bf16.msra.mxu0 0
        %720 = vmatprep.subr.bf16.mxu0 0
        %721 = vmatpush1.bf16.msra.mxu0 0
        %722 = vmatprep.subr.bf16.mxu0 0
        %723 = vmatpush1.bf16.msra.mxu0 0
        %724 = vmatprep.subr.bf16.mxu0 0
        %725 = vmatpush1.bf16.msra.mxu0 0
        %726 = vmatprep.subr.bf16.mxu0 0
        %727 = vmatpush1.bf16.msra.mxu0 0
        %728 = vmatprep.subr.bf16.mxu0 0
        %729 = vmatpush1.bf16.msra.mxu0 0
        %730 = vmatprep.subr.bf16.mxu0 0
        %731 = vmatpush1.bf16.msra.mxu0 0
        %732 = vmatprep.subr.bf16.mxu0 0
        %733 = vmatpush1.bf16.msra.mxu0 0
        %734 = vmatprep.subr.bf16.mxu0 0
        %735 = vmatpush1.bf16.msra.mxu0 0
        %736 = vmatprep.subr.bf16.mxu0 0
        %737 = vmatpush1.bf16.msra.mxu0 0
        %738 = vmatprep.subr.bf16.mxu0 0
        %739 = vmatpush1.bf16.msra.mxu0 0
        %740 = vmatprep.subr.bf16.mxu0 0
        %741 = vmatpush1.bf16.msra.mxu0 0
        %742 = vmatprep.subr.bf16.mxu0 0
        %743 = vmatpush1.bf16.msra.mxu0 0
        %744 = vmatprep.mubr.bf16.mxu0 0
        %745 = vmatmul.mubr.bf16.gmra.mrb[0].mxu0 %v489
        %v746 = vpop.f32.mrb[0].mxu0
        %v747 = vadd.f32 0.0, %v746
        %v748 = vpop.f32.mrb[0].mxu0
        %v749 = vadd.f32 0.0, %v748
        %v750 = vpop.f32.mrb[0].mxu0
        %v751 = vadd.f32 0.0, %v750
        %v752 = vpop.f32.mrb[0].mxu0
        %v753 = vadd.f32 0.0, %v752
        %754 = vdwg.mxu0
        %755 = vmatprep.subr.bf16.mxu0 %v450
        %756 = vmatpush1.bf16.msra.mxu0 %v449
        %757 = vmatprep.subr.bf16.mxu0 %v526
        %758 = vmatpush1.bf16.msra.mxu0 %v523
        %759 = vmatprep.subr.bf16.mxu0 0
        %760 = vmatpush1.bf16.msra.mxu0 0
        %761 = vmatprep.subr.bf16.mxu0 0
        %762 = vmatpush1.bf16.msra.mxu0 0
        %763 = vmatprep.subr.bf16.mxu0 0
        %764 = vmatpush1.bf16.msra.mxu0 0
        %765 = vmatprep.subr.bf16.mxu0 0
        %766 = vmatpush1.bf16.msra.mxu0 0
        %767 = vmatprep.subr.bf16.mxu0 0
        %768 = vmatpush1.bf16.msra.mxu0 0
        %769 = vmatprep.subr.bf16.mxu0 0
        %770 = vmatpush1.bf16.msra.mxu0 0
        %771 = vmatprep.subr.bf16.mxu0 0
        %772 = vmatpush1.bf16.msra.mxu0 0
        %773 = vmatprep.subr.bf16.mxu0 0
        %774 = vmatpush1.bf16.msra.mxu0 0
        %775 = vmatprep.subr.bf16.mxu0 0
        %776 = vmatpush1.bf16.msra.mxu0 0
        %777 = vmatprep.subr.bf16.mxu0 0
        %778 = vmatpush1.bf16.msra.mxu0 0
        %779 = vmatprep.subr.bf16.mxu0 0
        %780 = vmatpush1.bf16.msra.mxu0 0
        %781 = vmatprep.subr.bf16.mxu0 0
        %782 = vmatpush1.bf16.msra.mxu0 0
        %783 = vmatprep.subr.bf16.mxu0 0
        %784 = vmatpush1.bf16.msra.mxu0 0
        %785 = vmatprep.subr.bf16.mxu0 0
        %786 = vmatpush1.bf16.msra.mxu0 0
        %787 = vmatprep.mubr.bf16.mxu0 0
        %788 = vmatmul.mubr.bf16.gmra.mrb[0].mxu0 %v489
        %v789 = vpop.f32.mrb[0].mxu0
        %v790 = vadd.f32 0.0, %v789
        %v791 = vpop.f32.mrb[0].mxu0
        %v792 = vadd.f32 0.0, %v791
        %v793 = vpop.f32.mrb[0].mxu0
        %v794 = vadd.f32 0.0, %v793
        %v795 = vpop.f32.mrb[0].mxu0
        %v796 = vadd.f32 0.0, %v795
        %797 = vdwg.mxu0
        %798 = vmatprep.subr.bf16.mxu0 %v452
        %799 = vmatpush1.bf16.msra.mxu0 %v451
        %800 = vmatprep.subr.bf16.mxu0 %v532
        %801 = vmatpush1.bf16.msra.mxu0 %v529
        %802 = vmatprep.subr.bf16.mxu0 0
        %803 = vmatpush1.bf16.msra.mxu0 0
        %804 = vmatprep.subr.bf16.mxu0 0
        %805 = vmatpush1.bf16.msra.mxu0 0
        %806 = vmatprep.subr.bf16.mxu0 0
        %807 = vmatpush1.bf16.msra.mxu0 0
        %808 = vmatprep.subr.bf16.mxu0 0
        %809 = vmatpush1.bf16.msra.mxu0 0
        %810 = vmatprep.subr.bf16.mxu0 0
        %811 = vmatpush1.bf16.msra.mxu0 0
        %812 = vmatprep.subr.bf16.mxu0 0
        %813 = vmatpush1.bf16.msra.mxu0 0
        %814 = vmatprep.subr.bf16.mxu0 0
        %815 = vmatpush1.bf16.msra.mxu0 0
        %816 = vmatprep.subr.bf16.mxu0 0
        %817 = vmatpush1.bf16.msra.mxu0 0
        %818 = vmatprep.subr.bf16.mxu0 0
        %819 = vmatpush1.bf16.msra.mxu0 0
        %820 = vmatprep.subr.bf16.mxu0 0
        %821 = vmatpush1.bf16.msra.mxu0 0
        %822 = vmatprep.subr.bf16.mxu0 0
        %823 = vmatpush1.bf16.msra.mxu0 0
        %824 = vmatprep.subr.bf16.mxu0 0
        %825 = vmatpush1.bf16.msra.mxu0 0
        %826 = vmatprep.subr.bf16.mxu0 0
        %827 = vmatpush1.bf16.msra.mxu0 0
        %828 = vmatprep.subr.bf16.mxu0 0
        %829 = vmatpush1.bf16.msra.mxu0 0
        %830 = vmatprep.mubr.bf16.mxu0 0
        %831 = vmatmul.mubr.bf16.gmra.mrb[0].mxu0 %v489
        %v832 = vpop.f32.mrb[0].mxu0
        %v833 = vadd.f32 0.0, %v832
        %v834 = vpop.f32.mrb[0].mxu0
        %v835 = vadd.f32 0.0, %v834
        %v836 = vpop.f32.mrb[0].mxu0
        %v837 = vadd.f32 0.0, %v836
        %v838 = vpop.f32.mrb[0].mxu0
        %v839 = vadd.f32 0.0, %v838
        %840 = vdwg.mxu0
        %841 = vmatprep.subr.bf16.mxu0 %v454
        %842 = vmatpush1.bf16.msra.mxu0 %v453
        %843 = vmatprep.subr.bf16.mxu0 %v538
        %844 = vmatpush1.bf16.msra.mxu0 %v535
        %845 = vmatprep.subr.bf16.mxu0 0
        %846 = vmatpush1.bf16.msra.mxu0 0
        %847 = vmatprep.subr.bf16.mxu0 0
        %848 = vmatpush1.bf16.msra.mxu0 0
        %849 = vmatprep.subr.bf16.mxu0 0
        %850 = vmatpush1.bf16.msra.mxu0 0
        %851 = vmatprep.subr.bf16.mxu0 0
        %852 = vmatpush1.bf16.msra.mxu0 0
        %853 = vmatprep.subr.bf16.mxu0 0
        %854 = vmatpush1.bf16.msra.mxu0 0
        %855 = vmatprep.subr.bf16.mxu0 0
        %856 = vmatpush1.bf16.msra.mxu0 0
        %857 = vmatprep.subr.bf16.mxu0 0
        %858 = vmatpush1.bf16.msra.mxu0 0
        %859 = vmatprep.subr.bf16.mxu0 0
        %860 = vmatpush1.bf16.msra.mxu0 0
        %861 = vmatprep.subr.bf16.mxu0 0
        %862 = vmatpush1.bf16.msra.mxu0 0
        %863 = vmatprep.subr.bf16.mxu0 0
        %864 = vmatpush1.bf16.msra.mxu0 0
        %865 = vmatprep.subr.bf16.mxu0 0
        %866 = vmatpush1.bf16.msra.mxu0 0
        %867 = vmatprep.subr.bf16.mxu0 0
        %868 = vmatpush1.bf16.msra.mxu0 0
        %869 = vmatprep.subr.bf16.mxu0 0
        %870 = vmatpush1.bf16.msra.mxu0 0
        %871 = vmatprep.subr.bf16.mxu0 0
        %872 = vmatpush1.bf16.msra.mxu0 0
        %873 = vmatprep.mubr.bf16.mxu0 0
        %874 = vmatmul.mubr.bf16.gmra.mrb[0].mxu0 %v489
        %v875 = vpop.f32.mrb[0].mxu0
        %v876 = vadd.f32 0.0, %v875
        %v877 = vpop.f32.mrb[0].mxu0
        %v878 = vadd.f32 0.0, %v877
        %v879 = vpop.f32.mrb[0].mxu0
        %v880 = vadd.f32 0.0, %v879
        %v881 = vpop.f32.mrb[0].mxu0
        %v882 = vadd.f32 0.0, %v881
        %883 = vdwg.mxu0
        %v884 = vmax.f32 %v575, %v661
        %v885 = vmax.f32 %v577, %v663
        %v886 = vmax.f32 %v618, %v704
        %v887 = vmax.f32 %v620, %v706
        %v888 = vmax.f32 %v579, %v665
        %v889 = vmax.f32 %v581, %v667
        %v890 = vmax.f32 %v622, %v708
        %v891 = vmax.f32 %v624, %v710
        %v892 = vmax.f32 %v747, %v833
        %v893 = vmax.f32 %v749, %v835
        %v894 = vmax.f32 %v790, %v876
        %v895 = vmax.f32 %v792, %v878
        %v896 = vmax.f32 %v751, %v837
        %v897 = vmax.f32 %v753, %v839
        %v898 = vmax.f32 %v794, %v880
        %v899 = vmax.f32 %v796, %v882
        %v900 = vmax.f32 %v884, %v892
        %v901 = vmax.f32 %v885, %v893
        %v902 = vmax.f32 %v886, %v894
        %v903 = vmax.f32 %v887, %v895
        %v904 = vmax.f32 %v888, %v896
        %v905 = vmax.f32 %v889, %v897
        %v906 = vmax.f32 %v890, %v898
        %v907 = vmax.f32 %v891, %v899
        %v908 = vmax.f32 %v900, 0.0
        %v909 = vmax.f32 %v901, 0.0
        %v910 = vmax.f32 %v902, 0.0
        %v911 = vmax.f32 %v903, 0.0
        %v912 = vmax.f32 %v904, 0.0
        %v913 = vmax.f32 %v905, 0.0
        %v914 = vmax.f32 %v906, 0.0
        %v915 = vmax.f32 %v907, 0.0
        %v916 = vpack.c.bf16 %v912, %v908
        %v917 = vpack.c.bf16 %v913, %v909
        %v918 = vpack.c.bf16 %v914, %v910
        %v919 = vpack.c.bf16 %v915, %v911
        %923 = vrot.lane.b32.xlu0 %v916, 127
        %v924 = vpop.permute.xlu0 %923
        %925 = vrot.lane.b32.xlu0 %v917, 127
        %v926 = vpop.permute.xlu0 %925
        %927 = vrot.lane.b32.xlu0 %v918, 127
        %v928 = vpop.permute.xlu0 %927
        %vm929 = vcmask 1039360
        %v930 = vsel %vm929, %v924, %v926
        %v931 = vsel %vm929, %v926, %v928
        %935 = vrot.lane.b32.xlu0 %v916, 126
        %v936 = vpop.permute.xlu0 %935
        %937 = vrot.lane.b32.xlu0 %v917, 126
        %v938 = vpop.permute.xlu0 %937
        %939 = vrot.lane.b32.xlu0 %v918, 126
        %v940 = vpop.permute.xlu0 %939
        %vm941 = vcmask 1031168
        %v942 = vsel %vm941, %v936, %v938
        %v943 = vsel %vm941, %v938, %v940
        %947 = vrot.lane.b32.xlu0 %v916, 125
        %v948 = vpop.permute.xlu0 %947
        %949 = vrot.lane.b32.xlu0 %v917, 125
        %v950 = vpop.permute.xlu0 %949
        %951 = vrot.lane.b32.xlu0 %v918, 125
        %v952 = vpop.permute.xlu0 %951
        %vm953 = vcmask 1022976
        %v954 = vsel %vm953, %v948, %v950
        %v955 = vsel %vm953, %v950, %v952
        %959 = vrot.lane.b32.xlu0 %v916, 124
        %v960 = vpop.permute.xlu0 %959
        %961 = vrot.lane.b32.xlu0 %v917, 124
        %v962 = vpop.permute.xlu0 %961
        %963 = vrot.lane.b32.xlu0 %v918, 124
        %v964 = vpop.permute.xlu0 %963
        %vm965 = vcmask 1014784
        %v966 = vsel %vm965, %v960, %v962
        %v967 = vsel %vm965, %v962, %v964
        %971 = vrot.lane.b32.xlu0 %v916, 110
        %v972 = vpop.permute.xlu0 %971
        %973 = vrot.lane.b32.xlu0 %v917, 110
        %v974 = vpop.permute.xlu0 %973
        %975 = vrot.lane.b32.xlu0 %v918, 110
        %v976 = vpop.permute.xlu0 %975
        %vm977 = vcmask 900096
        %v978 = vsel %vm977, %v972, %v974
        %v979 = vsel %vm977, %v974, %v976
        %983 = vrot.lane.b32.xlu0 %v916, 109
        %v984 = vpop.permute.xlu0 %983
        %985 = vrot.lane.b32.xlu0 %v917, 109
        %v986 = vpop.permute.xlu0 %985
        %987 = vrot.lane.b32.xlu0 %v918, 109
        %v988 = vpop.permute.xlu0 %987
        %vm989 = vcmask 891904
        %v990 = vsel %vm989, %v984, %v986
        %v991 = vsel %vm989, %v986, %v988
        %995 = vrot.lane.b32.xlu0 %v916, 108
        %v996 = vpop.permute.xlu0 %995
        %997 = vrot.lane.b32.xlu0 %v917, 108
        %v998 = vpop.permute.xlu0 %997
        %999 = vrot.lane.b32.xlu0 %v918, 108
        %v1000 = vpop.permute.xlu0 %999
        %vm1001 = vcmask 883712
        %v1002 = vsel %vm1001, %v996, %v998
        %v1003 = vsel %vm1001, %v998, %v1000
        %1007 = vrot.lane.b32.xlu0 %v916, 107
        %v1008 = vpop.permute.xlu0 %1007
        %1009 = vrot.lane.b32.xlu0 %v917, 107
        %v1010 = vpop.permute.xlu0 %1009
        %1011 = vrot.lane.b32.xlu0 %v918, 107
        %v1012 = vpop.permute.xlu0 %1011
        %vm1013 = vcmask 875520
        %v1014 = vsel %vm1013, %v1008, %v1010
        %v1015 = vsel %vm1013, %v1010, %v1012
        %1019 = vrot.lane.b32.xlu0 %v916, 106
        %v1020 = vpop.permute.xlu0 %1019
        %1021 = vrot.lane.b32.xlu0 %v917, 106
        %v1022 = vpop.permute.xlu0 %1021
        %1023 = vrot.lane.b32.xlu0 %v918, 106
        %v1024 = vpop.permute.xlu0 %1023
        %vm1025 = vcmask 867328
        %v1026 = vsel %vm1025, %v1020, %v1022
        %v1027 = vsel %vm1025, %v1022, %v1024
        %1031 = vrot.lane.b32.xlu0 %v916, 92
        %v1032 = vpop.permute.xlu0 %1031
        %1033 = vrot.lane.b32.xlu0 %v917, 92
        %v1034 = vpop.permute.xlu0 %1033
        %1035 = vrot.lane.b32.xlu0 %v918, 92
        %v1036 = vpop.permute.xlu0 %1035
        %vm1037 = vcmask 752640
        %v1038 = vsel %vm1037, %v1032, %v1034
        %v1039 = vsel %vm1037, %v1034, %v1036
        %1043 = vrot.lane.b32.xlu0 %v916, 91
        %v1044 = vpop.permute.xlu0 %1043
        %1045 = vrot.lane.b32.xlu0 %v917, 91
        %v1046 = vpop.permute.xlu0 %1045
        %1047 = vrot.lane.b32.xlu0 %v918, 91
        %v1048 = vpop.permute.xlu0 %1047
        %vm1049 = vcmask 744448
        %v1050 = vsel %vm1049, %v1044, %v1046
        %v1051 = vsel %vm1049, %v1046, %v1048
        %1055 = vrot.lane.b32.xlu0 %v916, 90
        %v1056 = vpop.permute.xlu0 %1055
        %1057 = vrot.lane.b32.xlu0 %v917, 90
        %v1058 = vpop.permute.xlu0 %1057
        %1059 = vrot.lane.b32.xlu0 %v918, 90
        %v1060 = vpop.permute.xlu0 %1059
        %vm1061 = vcmask 736256
        %v1062 = vsel %vm1061, %v1056, %v1058
        %v1063 = vsel %vm1061, %v1058, %v1060
        %1067 = vrot.lane.b32.xlu0 %v916, 89
        %v1068 = vpop.permute.xlu0 %1067
        %1069 = vrot.lane.b32.xlu0 %v917, 89
        %v1070 = vpop.permute.xlu0 %1069
        %1071 = vrot.lane.b32.xlu0 %v918, 89
        %v1072 = vpop.permute.xlu0 %1071
        %vm1073 = vcmask 728064
        %v1074 = vsel %vm1073, %v1068, %v1070
        %v1075 = vsel %vm1073, %v1070, %v1072
        %1079 = vrot.lane.b32.xlu0 %v916, 88
        %v1080 = vpop.permute.xlu0 %1079
        %1081 = vrot.lane.b32.xlu0 %v917, 88
        %v1082 = vpop.permute.xlu0 %1081
        %1083 = vrot.lane.b32.xlu0 %v918, 88
        %v1084 = vpop.permute.xlu0 %1083
        %vm1085 = vcmask 719872
        %v1086 = vsel %vm1085, %v1080, %v1082
        %v1087 = vsel %vm1085, %v1082, %v1084
        %1091 = vrot.lane.b32.xlu0 %v916, 74
        %v1092 = vpop.permute.xlu0 %1091
        %1093 = vrot.lane.b32.xlu0 %v917, 74
        %v1094 = vpop.permute.xlu0 %1093
        %1095 = vrot.lane.b32.xlu0 %v918, 74
        %v1096 = vpop.permute.xlu0 %1095
        %vm1097 = vcmask 605184
        %v1098 = vsel %vm1097, %v1092, %v1094
        %v1099 = vsel %vm1097, %v1094, %v1096
        %1104 = vrot.lane.b32.xlu0 %v916, 111
        %v1105 = vpop.permute.xlu0 %1104
        %1106 = vrot.lane.b32.xlu0 %v917, 111
        %v1107 = vpop.permute.xlu0 %1106
        %1108 = vrot.lane.b32.xlu0 %v918, 111
        %v1109 = vpop.permute.xlu0 %1108
        %1110 = vrot.lane.b32.xlu0 %v919, 111
        %v1111 = vpop.permute.xlu0 %1110
        %vm1112 = vcmask 908288
        %v1113 = vsel %vm1112, %v1105, %v1107
        %v1114 = vsel %vm1112, %v1107, %v1109
        %v1115 = vsel %vm1112, %v1109, %v1111
        %1116 = vrot.lane.b32.xlu0 %v919, 110
        %v1117 = vpop.permute.xlu0 %1116
        %v1118 = vsel %vm977, %v976, %v1117
        %1119 = vrot.lane.b32.xlu0 %v919, 109
        %v1120 = vpop.permute.xlu0 %1119
        %v1121 = vsel %vm989, %v988, %v1120
        %1122 = vrot.lane.b32.xlu0 %v919, 108
        %v1123 = vpop.permute.xlu0 %1122
        %v1124 = vsel %vm1001, %v1000, %v1123
        %1125 = vrot.lane.b32.xlu0 %v919, 107
        %v1126 = vpop.permute.xlu0 %1125
        %v1127 = vsel %vm1013, %v1012, %v1126
        %1128 = vrot.lane.b32.xlu0 %v916, 73
        %v1129 = vpop.permute.xlu0 %1128
        %1130 = vrot.lane.b32.xlu0 %v917, 73
        %v1131 = vpop.permute.xlu0 %1130
        %1132 = vrot.lane.b32.xlu0 %v918, 73
        %v1133 = vpop.permute.xlu0 %1132
        %1134 = vrot.lane.b32.xlu0 %v930, 73
        %v1135 = vpop.permute.xlu0 %1134
        %1136 = vrot.lane.b32.xlu0 %v931, 73
        %v1137 = vpop.permute.xlu0 %1136
        %1138 = vrot.lane.b32.xlu0 %v928, 73
        %v1139 = vpop.permute.xlu0 %1138
        %1140 = vrot.lane.b32.xlu0 %v942, 73
        %v1141 = vpop.permute.xlu0 %1140
        %1142 = vrot.lane.b32.xlu0 %v943, 73
        %v1143 = vpop.permute.xlu0 %1142
        %1144 = vrot.lane.b32.xlu0 %v940, 73
        %v1145 = vpop.permute.xlu0 %1144
        %1146 = vrot.lane.b32.xlu0 %v954, 73
        %v1147 = vpop.permute.xlu0 %1146
        %1148 = vrot.lane.b32.xlu0 %v955, 73
        %v1149 = vpop.permute.xlu0 %1148
        %1150 = vrot.lane.b32.xlu0 %v952, 73
        %v1151 = vpop.permute.xlu0 %1150
        %1152 = vrot.lane.b32.xlu0 %v1113, 73
        %v1153 = vpop.permute.xlu0 %1152
        %1154 = vrot.lane.b32.xlu0 %v1114, 73
        %v1155 = vpop.permute.xlu0 %1154
        %1156 = vrot.lane.b32.xlu0 %v1115, 73
        %v1157 = vpop.permute.xlu0 %1156
        %1158 = vrot.lane.b32.xlu0 %v978, 73
        %v1159 = vpop.permute.xlu0 %1158
        %1160 = vrot.lane.b32.xlu0 %v979, 73
        %v1161 = vpop.permute.xlu0 %1160
        %1162 = vrot.lane.b32.xlu0 %v1118, 73
        %v1163 = vpop.permute.xlu0 %1162
        %1164 = vrot.lane.b32.xlu0 %v990, 73
        %v1165 = vpop.permute.xlu0 %1164
        %1166 = vrot.lane.b32.xlu0 %v991, 73
        %v1167 = vpop.permute.xlu0 %1166
        %1168 = vrot.lane.b32.xlu0 %v1121, 73
        %v1169 = vpop.permute.xlu0 %1168
        %1170 = vrot.lane.b32.xlu0 %v1002, 73
        %v1171 = vpop.permute.xlu0 %1170
        %1172 = vrot.lane.b32.xlu0 %v1003, 73
        %v1173 = vpop.permute.xlu0 %1172
        %1174 = vrot.lane.b32.xlu0 %v1124, 73
        %v1175 = vpop.permute.xlu0 %1174
        %1176 = vrot.lane.b32.xlu0 %v1014, 73
        %v1177 = vpop.permute.xlu0 %1176
        %1178 = vrot.lane.b32.xlu0 %v1015, 73
        %v1179 = vpop.permute.xlu0 %1178
        %1180 = vrot.lane.b32.xlu0 %v1127, 73
        %v1181 = vpop.permute.xlu0 %1180
        %vm1182 = vcmask 596992
        %v1183 = vsel %vm1182, %v1129, %v1131
        %v1184 = vsel %vm1182, %v1131, %v1133
        %v1185 = vsel %vm1182, %v1135, %v1137
        %v1186 = vsel %vm1182, %v1137, %v1139
        %v1187 = vsel %vm1182, %v1141, %v1143
        %v1188 = vsel %vm1182, %v1143, %v1145
        %v1189 = vsel %vm1182, %v1147, %v1149
        %v1190 = vsel %vm1182, %v1149, %v1151
        %v1191 = vsel %vm1182, %v1153, %v1155
        %v1192 = vsel %vm1182, %v1155, %v1157
        %v1193 = vsel %vm1182, %v1159, %v1161
        %v1194 = vsel %vm1182, %v1161, %v1163
        %v1195 = vsel %vm1182, %v1165, %v1167
        %v1196 = vsel %vm1182, %v1167, %v1169
        %v1197 = vsel %vm1182, %v1171, %v1173
        %v1198 = vsel %vm1182, %v1173, %v1175
        %v1199 = vsel %vm1182, %v1177, %v1179
        %v1200 = vsel %vm1182, %v1179, %v1181
        %v1228 = vld [vmem:[%s2] sm:$0xff]
        %v1229 = vld [vmem:[%s2 + $0x8] sm:$0xff]
        %v1230 = vld [vmem:[%s2 + $0x10] sm:$0xff]
        %v1231 = vld [vmem:[%s2 + $0x18] sm:$0xff]
        %v1232 = vld [vmem:[%s2 + $0x20] sm:$0xff]
        %v1233 = vld [vmem:[%s2 + $0x28] sm:$0xff]
        %v1234 = vld [vmem:[%s2 + $0x30] sm:$0xff]
        %v1235 = vld [vmem:[%s2 + $0x38] sm:$0xff]
        %v1236 = vld [vmem:[%s3] sm:$0xff]
        %v1237 = vld [vmem:[%s3 + $0x8] sm:$0xff]
        %v1238 = vld [vmem:[%s3 + $0x10] sm:$0xff]
        %v1239 = vld [vmem:[%s3 + $0x18] sm:$0xff]
        %1241 = vset.pattern.permute.xlu0 0
        %1242 = vperm.xlu0 %1241, %v1236
        %v1243 = vpop.permute.xlu0 %1242
        %1246 = vset.pattern.permute.xlu0 0
        %1247 = vperm.xlu0 %1246, %v1237
        %v1248 = vpop.permute.xlu0 %1247
        %1251 = vset.pattern.permute.xlu0 0
        %1252 = vperm.xlu0 %1251, %v1238
        %v1253 = vpop.permute.xlu0 %1252
        %1256 = vset.pattern.permute.xlu0 0
        %1257 = vperm.xlu0 %1256, %v1239
        %v1258 = vpop.permute.xlu0 %1257
        %v1268 = vunpack.c.l.b16 %v1228
        %v1269 = vunpack.c.h.b16 %v1228
        %v1270 = vunpack.c.l.b16 %v1229
        %v1271 = vunpack.c.h.b16 %v1229
        %v1272 = vunpack.c.l.b16 %v1230
        %v1273 = vunpack.c.h.b16 %v1230
        %v1274 = vunpack.c.l.b16 %v1231
        %v1275 = vunpack.c.h.b16 %v1231
        %v1276 = vunpack.c.l.b16 %v1232
        %v1277 = vunpack.c.h.b16 %v1232
        %v1278 = vunpack.c.l.b16 %v1233
        %v1279 = vunpack.c.h.b16 %v1233
        %v1280 = vunpack.c.l.b16 %v1234
        %v1281 = vunpack.c.h.b16 %v1234
        %v1282 = vunpack.c.l.b16 %v1235
        %v1283 = vunpack.c.h.b16 %v1235
        %v1284 = vpack.c.b16 %v1272, %v1268
        %v1285 = vpack.c.b16 %v1273, %v1269
        %v1286 = vpack.c.b16 %v1274, %v1270
        %v1287 = vpack.c.b16 %v1275, %v1271
        %v1288 = vpack.c.b16 %v1280, %v1276
        %v1289 = vpack.c.b16 %v1281, %v1277
        %v1290 = vpack.c.b16 %v1282, %v1278
        %v1291 = vpack.c.b16 %v1283, %v1279
        %vm1298 = vcmask 130048
        %v1300 = vsel %vm1298, %v1287, 0
        %v1303 = vsel %vm1298, %v1291, 0
        %1305 = vmatprep.subr.bf16.mxu0 %v917
        %1306 = vmatpush1.bf16.msra.mxu0 %v916
        %1307 = vmatprep.subr.bf16.mxu0 %v931
        %1308 = vmatpush1.bf16.msra.mxu0 %v930
        %1309 = vmatprep.subr.bf16.mxu0 %v943
        %1310 = vmatpush1.bf16.msra.mxu0 %v942
        %1311 = vmatprep.subr.bf16.mxu0 %v955
        %1312 = vmatpush1.bf16.msra.mxu0 %v954
        %1313 = vmatprep.subr.bf16.mxu0 %v967
        %1314 = vmatpush1.bf16.msra.mxu0 %v966
        %1315 = vmatprep.subr.bf16.mxu0 %v979
        %1316 = vmatpush1.bf16.msra.mxu0 %v978
        %1317 = vmatprep.subr.bf16.mxu0 %v991
        %1318 = vmatpush1.bf16.msra.mxu0 %v990
        %1319 = vmatprep.subr.bf16.mxu0 %v1003
        %1320 = vmatpush1.bf16.msra.mxu0 %v1002
        %1321 = vmatprep.subr.bf16.mxu0 %v1015
        %1322 = vmatpush1.bf16.msra.mxu0 %v1014
        %1323 = vmatprep.subr.bf16.mxu0 %v1027
        %1324 = vmatpush1.bf16.msra.mxu0 %v1026
        %1325 = vmatprep.subr.bf16.mxu0 %v1039
        %1326 = vmatpush1.bf16.msra.mxu0 %v1038
        %1327 = vmatprep.subr.bf16.mxu0 %v1051
        %1328 = vmatpush1.bf16.msra.mxu0 %v1050
        %1329 = vmatprep.subr.bf16.mxu0 %v1063
        %1330 = vmatpush1.bf16.msra.mxu0 %v1062
        %1331 = vmatprep.subr.bf16.mxu0 %v1075
        %1332 = vmatpush1.bf16.msra.mxu0 %v1074
        %1333 = vmatprep.subr.bf16.mxu0 %v1087
        %1334 = vmatpush1.bf16.msra.mxu0 %v1086
        %1335 = vmatprep.subr.bf16.mxu0 %v1099
        %1336 = vmatpush1.bf16.msra.mxu0 %v1098
        %1337 = vmatprep.mubr.bf16.mxu0 %v1285
        %1338 = vmatmul.mubr.bf16.gmra.mrb[0].mxu0 %v1284
        %v1339 = vpop.f32.mrb[0].mxu0
        %v1340 = vadd.f32 %v1243, %v1339
        %v1341 = vpop.f32.mrb[0].mxu0
        %v1342 = vadd.f32 %v1243, %v1341
        %v1343 = vpop.f32.mrb[0].mxu0
        %v1344 = vadd.f32 %v1248, %v1343
        %v1345 = vpop.f32.mrb[0].mxu0
        %v1346 = vadd.f32 %v1248, %v1345
        %1347 = vmatprep.mubr.bf16.mxu0 %v1289
        %1348 = vmatmul.mubr.bf16.gmra.mrb[0].mxu0 %v1288
        %v1349 = vpop.f32.mrb[0].mxu0
        %v1350 = vadd.f32 %v1253, %v1349
        %v1351 = vpop.f32.mrb[0].mxu0
        %v1352 = vadd.f32 %v1253, %v1351
        %v1353 = vpop.f32.mrb[0].mxu0
        %v1354 = vadd.f32 %v1258, %v1353
        %v1355 = vpop.f32.mrb[0].mxu0
        %v1356 = vadd.f32 %v1258, %v1355
        %1357 = vdwg.mxu0
        %1358 = vmatprep.subr.bf16.mxu0 %v1184
        %1359 = vmatpush1.bf16.msra.mxu0 %v1183
        %1360 = vmatprep.subr.bf16.mxu0 %v1186
        %1361 = vmatpush1.bf16.msra.mxu0 %v1185
        %1362 = vmatprep.subr.bf16.mxu0 %v1188
        %1363 = vmatpush1.bf16.msra.mxu0 %v1187
        %1364 = vmatprep.subr.bf16.mxu0 %v1190
        %1365 = vmatpush1.bf16.msra.mxu0 %v1189
        %1366 = vmatprep.subr.bf16.mxu0 %v1192
        %1367 = vmatpush1.bf16.msra.mxu0 %v1191
        %1368 = vmatprep.subr.bf16.mxu0 %v1194
        %1369 = vmatpush1.bf16.msra.mxu0 %v1193
        %1370 = vmatprep.subr.bf16.mxu0 %v1196
        %1371 = vmatpush1.bf16.msra.mxu0 %v1195
        %1372 = vmatprep.subr.bf16.mxu0 %v1198
        %1373 = vmatpush1.bf16.msra.mxu0 %v1197
        %1374 = vmatprep.subr.bf16.mxu0 %v1200
        %1375 = vmatpush1.bf16.msra.mxu0 %v1199
        %1376 = vmatprep.subr.bf16.mxu0 0
        %1377 = vmatpush1.bf16.msra.mxu0 0
        %1378 = vmatprep.subr.bf16.mxu0 0
        %1379 = vmatpush1.bf16.msra.mxu0 0
        %1380 = vmatprep.subr.bf16.mxu0 0
        %1381 = vmatpush1.bf16.msra.mxu0 0
        %1382 = vmatprep.subr.bf16.mxu0 0
        %1383 = vmatpush1.bf16.msra.mxu0 0
        %1384 = vmatprep.subr.bf16.mxu0 0
        %1385 = vmatpush1.bf16.msra.mxu0 0
        %1386 = vmatprep.subr.bf16.mxu0 0
        %1387 = vmatpush1.bf16.msra.mxu0 0
        %1388 = vmatprep.subr.bf16.mxu0 0
        %1389 = vmatpush1.bf16.msra.mxu0 0
        %1390 = vmatprep.mubr.bf16.mxu0 %v1300
        %1391 = vmatmul.mubr.bf16.gmra.mrb[0].mxu0 %v1286
        %v1392 = vpop.f32.mrb[0].mxu0
        %v1393 = vadd.f32 %v1340, %v1392
        %v1394 = vpop.f32.mrb[0].mxu0
        %v1395 = vadd.f32 %v1342, %v1394
        %v1396 = vpop.f32.mrb[0].mxu0
        %v1397 = vadd.f32 %v1344, %v1396
        %v1398 = vpop.f32.mrb[0].mxu0
        %v1399 = vadd.f32 %v1346, %v1398
        %1400 = vmatprep.mubr.bf16.mxu0 %v1303
        %1401 = vmatmul.mubr.bf16.gmra.mrb[0].mxu0 %v1290
        %v1402 = vpop.f32.mrb[0].mxu0
        %v1403 = vadd.f32 %v1350, %v1402
        %v1404 = vpop.f32.mrb[0].mxu0
        %v1405 = vadd.f32 %v1352, %v1404
        %v1406 = vpop.f32.mrb[0].mxu0
        %v1407 = vadd.f32 %v1354, %v1406
        %v1408 = vpop.f32.mrb[0].mxu0
        %v1409 = vadd.f32 %v1356, %v1408
        %1410 = vdwg.mxu0
        %1411 = vmatprep.subr.bf16.mxu0 0
        %1412 = vmatpush1.bf16.msra.mxu0 %v918
        %1413 = vmatprep.subr.bf16.mxu0 0
        %1414 = vmatpush1.bf16.msra.mxu0 %v928
        %1415 = vmatprep.subr.bf16.mxu0 0
        %1416 = vmatpush1.bf16.msra.mxu0 %v940
        %1417 = vmatprep.subr.bf16.mxu0 0
        %1418 = vmatpush1.bf16.msra.mxu0 %v952
        %1419 = vmatprep.subr.bf16.mxu0 0
        %1420 = vmatpush1.bf16.msra.mxu0 %v964
        %1421 = vmatprep.subr.bf16.mxu0 0
        %1422 = vmatpush1.bf16.msra.mxu0 %v976
        %1423 = vmatprep.subr.bf16.mxu0 0
        %1424 = vmatpush1.bf16.msra.mxu0 %v988
        %1425 = vmatprep.subr.bf16.mxu0 0
        %1426 = vmatpush1.bf16.msra.mxu0 %v1000
        %1427 = vmatprep.subr.bf16.mxu0 0
        %1428 = vmatpush1.bf16.msra.mxu0 %v1012
        %1429 = vmatprep.subr.bf16.mxu0 0
        %1430 = vmatpush1.bf16.msra.mxu0 %v1024
        %1431 = vmatprep.subr.bf16.mxu0 0
        %1432 = vmatpush1.bf16.msra.mxu0 %v1036
        %1433 = vmatprep.subr.bf16.mxu0 0
        %1434 = vmatpush1.bf16.msra.mxu0 %v1048
        %1435 = vmatprep.subr.bf16.mxu0 0
        %1436 = vmatpush1.bf16.msra.mxu0 %v1060
        %1437 = vmatprep.subr.bf16.mxu0 0
        %1438 = vmatpush1.bf16.msra.mxu0 %v1072
        %1439 = vmatprep.subr.bf16.mxu0 0
        %1440 = vmatpush1.bf16.msra.mxu0 %v1084
        %1441 = vmatprep.subr.bf16.mxu0 0
        %1442 = vmatpush1.bf16.msra.mxu0 %v1096
        %1443 = vmatprep.mubr.bf16.mxu0 %v1285
        %1444 = vmatmul.mubr.bf16.gmra.mrb[0].mxu0 %v1284
        %v1445 = vpop.f32.mrb[0].mxu0
        %v1446 = vadd.f32 %v1243, %v1445
        %v1447 = vpop.f32.mrb[0].mxu0
        %v1448 = vpop.f32.mrb[0].mxu0
        %v1449 = vadd.f32 %v1248, %v1448
        %v1450 = vpop.f32.mrb[0].mxu0
        %1451 = vmatprep.mubr.bf16.mxu0 %v1289
        %1452 = vmatmul.mubr.bf16.gmra.mrb[0].mxu0 %v1288
        %v1453 = vpop.f32.mrb[0].mxu0
        %v1454 = vadd.f32 %v1253, %v1453
        %v1455 = vpop.f32.mrb[0].mxu0
        %v1456 = vpop.f32.mrb[0].mxu0
        %v1457 = vadd.f32 %v1258, %v1456
        %v1458 = vpop.f32.mrb[0].mxu0
        %1459 = vdwg.mxu0
        %1460 = vmatprep.subr.bf16.mxu0 0
        %1461 = vmatpush1.bf16.msra.mxu0 %v1133
        %1462 = vmatprep.subr.bf16.mxu0 0
        %1463 = vmatpush1.bf16.msra.mxu0 %v1139
        %1464 = vmatprep.subr.bf16.mxu0 0
        %1465 = vmatpush1.bf16.msra.mxu0 %v1145
        %1466 = vmatprep.subr.bf16.mxu0 0
        %1467 = vmatpush1.bf16.msra.mxu0 %v1151
        %1468 = vmatprep.subr.bf16.mxu0 0
        %1469 = vmatpush1.bf16.msra.mxu0 %v1157
        %1470 = vmatprep.subr.bf16.mxu0 0
        %1471 = vmatpush1.bf16.msra.mxu0 %v1163
        %1472 = vmatprep.subr.bf16.mxu0 0
        %1473 = vmatpush1.bf16.msra.mxu0 %v1169
        %1474 = vmatprep.subr.bf16.mxu0 0
        %1475 = vmatpush1.bf16.msra.mxu0 %v1175
        %1476 = vmatprep.subr.bf16.mxu0 0
        %1477 = vmatpush1.bf16.msra.mxu0 %v1181
        %1478 = vmatprep.subr.bf16.mxu0 0
        %1479 = vmatpush1.bf16.msra.mxu0 0
        %1480 = vmatprep.subr.bf16.mxu0 0
        %1481 = vmatpush1.bf16.msra.mxu0 0
        %1482 = vmatprep.subr.bf16.mxu0 0
        %1483 = vmatpush1.bf16.msra.mxu0 0
        %1484 = vmatprep.subr.bf16.mxu0 0
        %1485 = vmatpush1.bf16.msra.mxu0 0
        %1486 = vmatprep.subr.bf16.mxu0 0
        %1487 = vmatpush1.bf16.msra.mxu0 0
        %1488 = vmatprep.subr.bf16.mxu0 0
        %1489 = vmatpush1.bf16.msra.mxu0 0
        %1490 = vmatprep.subr.bf16.mxu0 0
        %1491 = vmatpush1.bf16.msra.mxu0 0
        %1492 = vmatprep.mubr.bf16.mxu0 %v1300
        %1493 = vmatmul.mubr.bf16.gmra.mrb[0].mxu0 %v1286
        %v1494 = vpop.f32.mrb[0].mxu0
        %v1495 = vadd.f32 %v1446, %v1494
        %v1496 = vpop.f32.mrb[0].mxu0
        %v1497 = vpop.f32.mrb[0].mxu0
        %v1498 = vadd.f32 %v1449, %v1497
        %v1499 = vpop.f32.mrb[0].mxu0
        %1500 = vmatprep.mubr.bf16.mxu0 %v1303
        %1501 = vmatmul.mubr.bf16.gmra.mrb[0].mxu0 %v1290
        %v1502 = vpop.f32.mrb[0].mxu0
        %v1503 = vadd.f32 %v1454, %v1502
        %v1504 = vpop.f32.mrb[0].mxu0
        %v1505 = vpop.f32.mrb[0].mxu0
        %v1506 = vadd.f32 %v1457, %v1505
        %v1507 = vpop.f32.mrb[0].mxu0
        %1508 = vdwg.mxu0
        %v1509 = vmax.f32 %v1393, 0.0
        %v1510 = vmax.f32 %v1395, 0.0
        %v1511 = vmax.f32 %v1495, 0.0
        %v1512 = vmax.f32 %v1397, 0.0
        %v1513 = vmax.f32 %v1399, 0.0
        %v1514 = vmax.f32 %v1498, 0.0
        %v1515 = vmax.f32 %v1403, 0.0
        %v1516 = vmax.f32 %v1405, 0.0
        %v1517 = vmax.f32 %v1503, 0.0
        %v1518 = vmax.f32 %v1407, 0.0
        %v1519 = vmax.f32 %v1409, 0.0
        %v1520 = vmax.f32 %v1506, 0.0
        %v1521 = vld [vmem:[%s4] sm:$0xff]
        %v1522 = vld [vmem:[%s4 + $0x8] sm:$0xff]
        %v1523 = vld [vmem:[%s4 + $0x10] sm:$0xff]
        %v1524 = vld [vmem:[%s4 + $0x18] sm:$0xff]
        %v1525 = vld [vmem:[%s4 + $0x20] sm:$0xff]
        %v1526 = vld [vmem:[%s4 + $0x28] sm:$0xff]
        %v1527 = vld [vmem:[%s4 + $0x30] sm:$0xff]
        %v1528 = vld [vmem:[%s4 + $0x38] sm:$0xff]
        %v1529 = vld [vmem:[%s4 + $0x40] sm:$0xff]
        %v1530 = vld [vmem:[%s4 + $0x48] sm:$0xff]
        %v1531 = vld [vmem:[%s4 + $0x50] sm:$0xff]
        %v1532 = vld [vmem:[%s4 + $0x58] sm:$0xff]
        %v1533 = vld [vmem:[%s4 + $0x60] sm:$0xff]
        %v1534 = vld [vmem:[%s4 + $0x68] sm:$0xff]
        %v1535 = vld [vmem:[%s4 + $0x70] sm:$0xff]
        %v1536 = vld [vmem:[%s4 + $0x78] sm:$0xff]
        %v1537 = vld [vmem:[%s4 + $0x80] sm:$0xff]
        %v1538 = vld [vmem:[%s4 + $0x88] sm:$0xff]
        %v1539 = vld [vmem:[%s4 + $0x90] sm:$0xff]
        %v1540 = vld [vmem:[%s4 + $0x98] sm:$0xff]
        %v1541 = vld [vmem:[%s4 + $0xa0] sm:$0xff]
        %v1542 = vld [vmem:[%s4 + $0xa8] sm:$0xff]
        %v1543 = vld [vmem:[%s4 + $0xb0] sm:$0xff]
        %v1544 = vld [vmem:[%s4 + $0xb8] sm:$0xff]
        %v1545 = vld [vmem:[%s4 + $0xc0] sm:$0xff]
        %v1546 = vld [vmem:[%s4 + $0xc8] sm:$0xff]
        %v1547 = vld [vmem:[%s4 + $0xd0] sm:$0xff]
        %v1548 = vld [vmem:[%s4 + $0xd8] sm:$0xff]
        %v1549 = vld [vmem:[%s4 + $0xe0] sm:$0xff]
        %v1550 = vld [vmem:[%s4 + $0xe8] sm:$0xff]
        %v1551 = vld [vmem:[%s4 + $0xf0] sm:$0xff]
        %v1552 = vld [vmem:[%s4 + $0xf8] sm:$0xff]
        %v1553 = vld [vmem:[%s4 + $0x100] sm:$0xff]
        %v1554 = vld [vmem:[%s4 + $0x108] sm:$0xff]
        %v1555 = vld [vmem:[%s4 + $0x110] sm:$0xff]
        %v1556 = vld [vmem:[%s4 + $0x118] sm:$0xff]
        %v1557 = vld [vmem:[%s4 + $0x120] sm:$0xff]
        %v1558 = vld [vmem:[%s4 + $0x128] sm:$0xff]
        %v1559 = vld [vmem:[%s4 + $0x130] sm:$0xff]
        %v1560 = vld [vmem:[%s4 + $0x138] sm:$0xff]
        %v1561 = vld [vmem:[%s4 + $0x140] sm:$0xff]
        %v1562 = vld [vmem:[%s4 + $0x148] sm:$0xff]
        %v1563 = vld [vmem:[%s4 + $0x150] sm:$0xff]
        %v1564 = vld [vmem:[%s4 + $0x158] sm:$0xff]
        %v1565 = vld [vmem:[%s4 + $0x160] sm:$0xff]
        %v1566 = vld [vmem:[%s4 + $0x168] sm:$0xff]
        %v1567 = vld [vmem:[%s4 + $0x170] sm:$0xff]
        %v1568 = vld [vmem:[%s4 + $0x178] sm:$0xff]
        %v1569 = vld [vmem:[%s4 + $0x180] sm:$0xff]
        %v1570 = vld [vmem:[%s4 + $0x188] sm:$0xff]
        %v1571 = vld [vmem:[%s4 + $0x190] sm:$0xff]
        %v1572 = vld [vmem:[%s4 + $0x198] sm:$0xff]
        %v1573 = vld [vmem:[%s4 + $0x1a0] sm:$0xff]
        %v1574 = vld [vmem:[%s4 + $0x1a8] sm:$0xff]
        %v1575 = vld [vmem:[%s4 + $0x1b0] sm:$0xff]
        %v1576 = vld [vmem:[%s4 + $0x1b8] sm:$0xff]
        %v1577 = vld [vmem:[%s4 + $0x1c0] sm:$0xff]
        %v1578 = vld [vmem:[%s4 + $0x1c8] sm:$0xff]
        %v1579 = vld [vmem:[%s4 + $0x1d0] sm:$0xff]
        %v1580 = vld [vmem:[%s4 + $0x1d8] sm:$0xff]
        %v1581 = vld [vmem:[%s4 + $0x1e0] sm:$0xff]
        %v1582 = vld [vmem:[%s4 + $0x1e8] sm:$0xff]
        %v1583 = vld [vmem:[%s4 + $0x1f0] sm:$0xff]
        %v1584 = vld [vmem:[%s4 + $0x1f8] sm:$0xff]
        %v1585 = vld [vmem:[%s4 + $0x200] sm:$0xff]
        %v1586 = vld [vmem:[%s4 + $0x208] sm:$0xff]
        %v1587 = vld [vmem:[%s4 + $0x210] sm:$0xff]
        %v1588 = vld [vmem:[%s4 + $0x218] sm:$0xff]
        %v1589 = vld [vmem:[%s4 + $0x220] sm:$0xff]
        %v1590 = vld [vmem:[%s4 + $0x228] sm:$0xff]
        %v1591 = vld [vmem:[%s4 + $0x230] sm:$0xff]
        %v1592 = vld [vmem:[%s4 + $0x238] sm:$0xff]
        %v1593 = vld [vmem:[%s4 + $0x240] sm:$0xff]
        %v1594 = vld [vmem:[%s4 + $0x248] sm:$0xff]
        %v1595 = vld [vmem:[%s4 + $0x250] sm:$0xff]
        %v1596 = vld [vmem:[%s4 + $0x258] sm:$0xff]
        %v1597 = vld [vmem:[%s4 + $0x260] sm:$0xff]
        %v1598 = vld [vmem:[%s4 + $0x268] sm:$0xff]
        %v1599 = vld [vmem:[%s4 + $0x270] sm:$0xff]
        %v1600 = vld [vmem:[%s4 + $0x278] sm:$0xff]
        %v1601 = vld [vmem:[%s4 + $0x280] sm:$0xf]
        %v1602 = vld [vmem:[%s4 + $0x288] sm:$0xf]
        %vm1603 = vcmask 556032
        %v1605 = vsel %vm1603, %v1511, 0
        %v1608 = vsel %vm1603, %v1514, 0
        %v1611 = vsel %vm1603, %v1517, 0
        %v1614 = vsel %vm1603, %v1520, 0
        %vm1616 = vcmask 1043456
        %v1618 = vsel %vm1616, %v1601, 0
        %v1621 = vsel %vm1616, %v1602, 0
        %1623 = vmatprep.subr.mxu0 %v1522
        %1624 = vmatpush1.msra.mxu0 %v1521
        %1625 = vmatprep.subr.mxu0 %v1524
        %1626 = vmatpush1.msra.mxu0 %v1523
        %1627 = vmatprep.subr.mxu0 %v1526
        %1628 = vmatpush1.msra.mxu0 %v1525
        %1629 = vmatprep.subr.mxu0 %v1528
        %1630 = vmatpush1.msra.mxu0 %v1527
        %1631 = vmatprep.subr.mxu0 %v1530
        %1632 = vmatpush1.msra.mxu0 %v1529
        %1633 = vmatprep.subr.mxu0 %v1532
        %1634 = vmatpush1.msra.mxu0 %v1531
        %1635 = vmatprep.subr.mxu0 %v1534
        %1636 = vmatpush1.msra.mxu0 %v1533
        %1637 = vmatprep.subr.mxu0 %v1536
        %1638 = vmatpush1.msra.mxu0 %v1535
        %1639 = vmatprep.subr.mxu0 %v1538
        %1640 = vmatpush1.msra.mxu0 %v1537
        %1641 = vmatprep.subr.mxu0 %v1540
        %1642 = vmatpush1.msra.mxu0 %v1539
        %1643 = vmatprep.subr.mxu0 %v1542
        %1644 = vmatpush1.msra.mxu0 %v1541
        %1645 = vmatprep.subr.mxu0 %v1544
        %1646 = vmatpush1.msra.mxu0 %v1543
        %1647 = vmatprep.subr.mxu0 %v1546
        %1648 = vmatpush1.msra.mxu0 %v1545
        %1649 = vmatprep.subr.mxu0 %v1548
        %1650 = vmatpush1.msra.mxu0 %v1547
        %1651 = vmatprep.subr.mxu0 %v1550
        %1652 = vmatpush1.msra.mxu0 %v1549
        %1653 = vmatprep.subr.mxu0 %v1552
        %1654 = vmatpush1.msra.mxu0 %v1551
        %1655 = vmatprep.subr.mxu0 %v1554
        %1656 = vmatpush1.msra.mxu0 %v1553
        %1657 = vmatprep.subr.mxu0 %v1556
        %1658 = vmatpush1.msra.mxu0 %v1555
        %1659 = vmatprep.subr.mxu0 %v1558
        %1660 = vmatpush1.msra.mxu0 %v1557
        %1661 = vmatprep.subr.mxu0 %v1560
        %1662 = vmatpush1.msra.mxu0 %v1559
        %1663 = vmatprep.subr.mxu0 %v1562
        %1664 = vmatpush1.msra.mxu0 %v1561
        %1665 = vmatprep.subr.mxu0 %v1564
        %1666 = vmatpush1.msra.mxu0 %v1563
        %1667 = vmatprep.subr.mxu0 %v1566
        %1668 = vmatpush1.msra.mxu0 %v1565
        %1669 = vmatprep.subr.mxu0 %v1568
        %1670 = vmatpush1.msra.mxu0 %v1567
        %1671 = vmatprep.subr.mxu0 %v1570
        %1672 = vmatpush1.msra.mxu0 %v1569
        %1673 = vmatprep.subr.mxu0 %v1572
        %1674 = vmatpush1.msra.mxu0 %v1571
        %1675 = vmatprep.subr.mxu0 %v1574
        %1676 = vmatpush1.msra.mxu0 %v1573
        %1677 = vmatprep.subr.mxu0 %v1576
        %1678 = vmatpush1.msra.mxu0 %v1575
        %1679 = vmatprep.subr.mxu0 %v1578
        %1680 = vmatpush1.msra.mxu0 %v1577
        %1681 = vmatprep.subr.mxu0 %v1580
        %1682 = vmatpush1.msra.mxu0 %v1579
        %1683 = vmatprep.subr.mxu0 %v1582
        %1684 = vmatpush1.msra.mxu0 %v1581
        %1685 = vmatprep.subr.mxu0 %v1584
        %1686 = vmatpush1.msra.mxu0 %v1583
        %1687 = vmatprep.mubr.f32.mxu0 %v1510
        %1688 = vmatmul.mubr.f32.gmra.mrb[0].mxu0 %v1509
        %v1689 = vpop.f32.mrb[0].mxu0
        %v1690 = vadd.f32 0.0, %v1689
        %v1691 = vpop.f32.mrb[0].mxu0
        %v1692 = vadd.f32 0.0, %v1691
        %1693 = vmatprep.mubr.f32.mxu0 %v1513
        %1694 = vmatmul.mubr.f32.gmra.mrb[0].mxu0 %v1512
        %v1695 = vpop.f32.mrb[0].mxu0
        %v1696 = vadd.f32 0.0, %v1695
        %v1697 = vpop.f32.mrb[0].mxu0
        %v1698 = vadd.f32 0.0, %v1697
        %1699 = vmatprep.mubr.f32.mxu0 %v1516
        %1700 = vmatmul.mubr.f32.gmra.mrb[0].mxu0 %v1515
        %v1701 = vpop.f32.mrb[0].mxu0
        %v1702 = vadd.f32 0.0, %v1701
        %v1703 = vpop.f32.mrb[0].mxu0
        %v1704 = vadd.f32 0.0, %v1703
        %1705 = vmatprep.mubr.f32.mxu0 %v1519
        %1706 = vmatmul.mubr.f32.gmra.mrb[0].mxu0 %v1518
        %v1707 = vpop.f32.mrb[0].mxu0
        %v1708 = vadd.f32 0.0, %v1707
        %v1709 = vpop.f32.mrb[0].mxu0
        %v1710 = vadd.f32 0.0, %v1709
        %1711 = vdwg.mxu0
        %1712 = vmatprep.subr.mxu0 %v1586
        %1713 = vmatpush1.msra.mxu0 %v1585
        %1714 = vmatprep.subr.mxu0 %v1588
        %1715 = vmatpush1.msra.mxu0 %v1587
        %1716 = vmatprep.subr.mxu0 %v1590
        %1717 = vmatpush1.msra.mxu0 %v1589
        %1718 = vmatprep.subr.mxu0 %v1592
        %1719 = vmatpush1.msra.mxu0 %v1591
        %1720 = vmatprep.subr.mxu0 %v1594
        %1721 = vmatpush1.msra.mxu0 %v1593
        %1722 = vmatprep.subr.mxu0 %v1596
        %1723 = vmatpush1.msra.mxu0 %v1595
        %1724 = vmatprep.subr.mxu0 %v1598
        %1725 = vmatpush1.msra.mxu0 %v1597
        %1726 = vmatprep.subr.mxu0 %v1600
        %1727 = vmatpush1.msra.mxu0 %v1599
        %1728 = vmatprep.subr.mxu0 %v1621
        %1729 = vmatpush1.msra.mxu0 %v1618
        %1730 = vmatprep.subr.mxu0 0.0
        %1731 = vmatpush1.msra.mxu0 0.0
        %1732 = vmatprep.subr.mxu0 0.0
        %1733 = vmatpush1.msra.mxu0 0.0
        %1734 = vmatprep.subr.mxu0 0.0
        %1735 = vmatpush1.msra.mxu0 0.0
        %1736 = vmatprep.subr.mxu0 0.0
        %1737 = vmatpush1.msra.mxu0 0.0
        %1738 = vmatprep.subr.mxu0 0.0
        %1739 = vmatpush1.msra.mxu0 0.0
        %1740 = vmatprep.subr.mxu0 0.0
        %1741 = vmatpush1.msra.mxu0 0.0
        %1742 = vmatprep.subr.mxu0 0.0
        %1743 = vmatpush1.msra.mxu0 0.0
        %1744 = vmatprep.subr.mxu0 0.0
        %1745 = vmatpush1.msra.mxu0 0.0
        %1746 = vmatprep.subr.mxu0 0.0
        %1747 = vmatpush1.msra.mxu0 0.0
        %1748 = vmatprep.subr.mxu0 0.0
        %1749 = vmatpush1.msra.mxu0 0.0
        %1750 = vmatprep.subr.mxu0 0.0
        %1751 = vmatpush1.msra.mxu0 0.0
        %1752 = vmatprep.subr.mxu0 0.0
        %1753 = vmatpush1.msra.mxu0 0.0
        %1754 = vmatprep.subr.mxu0 0.0
        %1755 = vmatpush1.msra.mxu0 0.0
        %1756 = vmatprep.subr.mxu0 0.0
        %1757 = vmatpush1.msra.mxu0 0.0
        %1758 = vmatprep.subr.mxu0 0.0
        %1759 = vmatpush1.msra.mxu0 0.0
        %1760 = vmatprep.subr.mxu0 0.0
        %1761 = vmatpush1.msra.mxu0 0.0
        %1762 = vmatprep.subr.mxu0 0.0
        %1763 = vmatpush1.msra.mxu0 0.0
        %1764 = vmatprep.subr.mxu0 0.0
        %1765 = vmatpush1.msra.mxu0 0.0
        %1766 = vmatprep.subr.mxu0 0.0
        %1767 = vmatpush1.msra.mxu0 0.0
        %1768 = vmatprep.subr.mxu0 0.0
        %1769 = vmatpush1.msra.mxu0 0.0
        %1770 = vmatprep.subr.mxu0 0.0
        %1771 = vmatpush1.msra.mxu0 0.0
        %1772 = vmatprep.subr.mxu0 0.0
        %1773 = vmatpush1.msra.mxu0 0.0
        %1774 = vmatprep.subr.mxu0 0.0
        %1775 = vmatpush1.msra.mxu0 0.0
        %1776 = vmatprep.mubr.f32.mxu0 0.0
        %1777 = vmatmul.mubr.f32.gmra.mrb[0].mxu0 %v1605
        %v1778 = vpop.f32.mrb[0].mxu0
        %v1779 = vadd.f32 %v1690, %v1778
        %v1780 = vpop.f32.mrb[0].mxu0
        %v1781 = vadd.f32 %v1692, %v1780
        %1782 = vmatprep.mubr.f32.mxu0 0.0
        %1783 = vmatmul.mubr.f32.gmra.mrb[0].mxu0 %v1608
        %v1784 = vpop.f32.mrb[0].mxu0
        %v1785 = vadd.f32 %v1696, %v1784
        %v1786 = vpop.f32.mrb[0].mxu0
        %v1787 = vadd.f32 %v1698, %v1786
        %1788 = vmatprep.mubr.f32.mxu0 0.0
        %1789 = vmatmul.mubr.f32.gmra.mrb[0].mxu0 %v1611
        %v1790 = vpop.f32.mrb[0].mxu0
        %v1791 = vadd.f32 %v1702, %v1790
        %v1792 = vpop.f32.mrb[0].mxu0
        %v1793 = vadd.f32 %v1704, %v1792
        %1794 = vmatprep.mubr.f32.mxu0 0.0
        %1795 = vmatmul.mubr.f32.gmra.mrb[0].mxu0 %v1614
        %v1796 = vpop.f32.mrb[0].mxu0
        %v1797 = vadd.f32 %v1708, %v1796
        %v1798 = vpop.f32.mrb[0].mxu0
        %v1799 = vadd.f32 %v1710, %v1798
        %1800 = vdwg.mxu0
        %1805 = vrot.lane.b32.xlu0 %v1779, 64
        %v1806 = vpop.permute.xlu0 %1805
        %1807 = vrot.lane.b32.xlu0 %v1785, 64
        %v1808 = vpop.permute.xlu0 %1807
        %1809 = vrot.lane.b32.xlu0 %v1791, 64
        %v1810 = vpop.permute.xlu0 %1809
        %1811 = vrot.lane.b32.xlu0 %v1797, 64
        %v1812 = vpop.permute.xlu0 %1811
        %v1817 = vmax.f32 %v1779, %v1806
        %v1818 = vmax.f32 %v1785, %v1808
        %v1819 = vmax.f32 %v1791, %v1810
        %v1820 = vmax.f32 %v1797, %v1812
        %1825 = vrot.lane.b32.xlu0 %v1781, 64
        %v1826 = vpop.permute.xlu0 %1825
        %1827 = vrot.lane.b32.xlu0 %v1787, 64
        %v1828 = vpop.permute.xlu0 %1827
        %1829 = vrot.lane.b32.xlu0 %v1793, 64
        %v1830 = vpop.permute.xlu0 %1829
        %1831 = vrot.lane.b32.xlu0 %v1799, 64
        %v1832 = vpop.permute.xlu0 %1831
        %v1837 = vmax.f32 %v1781, %v1826
        %v1838 = vmax.f32 %v1787, %v1828
        %v1839 = vmax.f32 %v1793, %v1830
        %v1840 = vmax.f32 %v1799, %v1832
        %v1841 = vmax.f32 %v1817, %v1837
        %v1842 = vmax.f32 %v1818, %v1838
        %v1843 = vmax.f32 %v1819, %v1839
        %v1844 = vmax.f32 %v1820, %v1840
        %v1845 = vld [vmem:[%s5] sm:$0xff]
        %v1846 = vld [vmem:[%s5 + $0x8] sm:$0xff]
        %v1847 = vld [vmem:[%s5 + $0x10] sm:$0xff]
        %v1848 = vld [vmem:[%s5 + $0x18] sm:$0xff]
        %v1849 = vld [vmem:[%s5 + $0x20] sm:$0xff]
        %v1850 = vld [vmem:[%s5 + $0x28] sm:$0xff]
        %v1851 = vld [vmem:[%s5 + $0x30] sm:$0xff]
        %v1852 = vld [vmem:[%s5 + $0x38] sm:$0xff]
        %v1853 = vld [vmem:[%s5 + $0x40] sm:$0xff]
        %v1854 = vld [vmem:[%s5 + $0x48] sm:$0xff]
        %v1855 = vld [vmem:[%s5 + $0x50] sm:$0xff]
        %v1856 = vld [vmem:[%s5 + $0x58] sm:$0xff]
        %v1857 = vld [vmem:[%s5 + $0x60] sm:$0xff]
        %v1858 = vld [vmem:[%s5 + $0x68] sm:$0xff]
        %v1859 = vld [vmem:[%s5 + $0x70] sm:$0xff]
        %v1860 = vld [vmem:[%s5 + $0x78] sm:$0xff]
        %v1861 = vmul.f32 %v1841, %v1845
        %v1862 = vmul.f32 %v1842, %v1846
        %v1863 = vmul.f32 %v1843, %v1847
        %v1864 = vmul.f32 %v1844, %v1848
        %v1865 = vmul.f32 %v1841, %v1849
        %v1866 = vmul.f32 %v1842, %v1850
        %v1867 = vmul.f32 %v1843, %v1851
        %v1868 = vmul.f32 %v1844, %v1852
        %v1869 = vmul.f32 %v1841, %v1853
        %v1870 = vmul.f32 %v1842, %v1854
        %v1871 = vmul.f32 %v1843, %v1855
        %v1872 = vmul.f32 %v1844, %v1856
        %v1873 = vmul.f32 %v1841, %v1857
        %v1874 = vmul.f32 %v1842, %v1858
        %v1875 = vmul.f32 %v1843, %v1859
        %v1876 = vmul.f32 %v1844, %v1860
        %vm1877 = vcmask 400384
        %v1878 = vsel %vm1877, %v1861, 0.0
        %v1879 = vsel %vm1877, %v1862, 0.0
        %v1880 = vadd.f32 %v1878, %v1879
        %v1881 = vsel %vm1877, %v1863, 0.0
        %v1882 = vadd.f32 %v1880, %v1881
        %v1883 = vsel %vm1877, %v1864, 0.0
        %v1884 = vadd.f32 %v1882, %v1883
        %v1885 = vrot.slane %v1884, 4
        %v1886 = vadd.f32 %v1884, %v1885
        %v1887 = vrot.slane %v1886, 2
        %v1888 = vadd.f32 %v1886, %v1887
        %v1889 = vrot.slane %v1888, 1
        %v1890 = vadd.f32 %v1888, %v1889
        %v1891 = vsel %vm1877, %v1865, 0.0
        %v1892 = vsel %vm1877, %v1866, 0.0
        %v1893 = vadd.f32 %v1891, %v1892
        %v1894 = vsel %vm1877, %v1867, 0.0
        %v1895 = vadd.f32 %v1893, %v1894
        %v1896 = vsel %vm1877, %v1868, 0.0
        %v1897 = vadd.f32 %v1895, %v1896
        %v1898 = vrot.slane %v1897, 4
        %v1899 = vadd.f32 %v1897, %v1898
        %v1900 = vrot.slane %v1899, 2
        %v1901 = vadd.f32 %v1899, %v1900
        %v1902 = vrot.slane %v1901, 1
        %v1903 = vadd.f32 %v1901, %v1902
        %v1904 = vsel %vm1877, %v1869, 0.0
        %v1905 = vsel %vm1877, %v1870, 0.0
        %v1906 = vadd.f32 %v1904, %v1905
        %v1907 = vsel %vm1877, %v1871, 0.0
        %v1908 = vadd.f32 %v1906, %v1907
        %v1909 = vsel %vm1877, %v1872, 0.0
        %v1910 = vadd.f32 %v1908, %v1909
        %v1911 = vrot.slane %v1910, 4
        %v1912 = vadd.f32 %v1910, %v1911
        %v1913 = vrot.slane %v1912, 2
        %v1914 = vadd.f32 %v1912, %v1913
        %v1915 = vrot.slane %v1914, 1
        %v1916 = vadd.f32 %v1914, %v1915
        %v1917 = vsel %vm1877, %v1873, 0.0
        %v1918 = vsel %vm1877, %v1874, 0.0
        %v1919 = vadd.f32 %v1917, %v1918
        %v1920 = vsel %vm1877, %v1875, 0.0
        %v1921 = vadd.f32 %v1919, %v1920
        %v1922 = vsel %vm1877, %v1876, 0.0
        %v1923 = vadd.f32 %v1921, %v1922
        %v1924 = vrot.slane %v1923, 4
        %v1925 = vadd.f32 %v1923, %v1924
        %v1926 = vrot.slane %v1925, 2
        %v1927 = vadd.f32 %v1925, %v1926
        %v1928 = vrot.slane %v1927, 1
        %v1929 = vadd.f32 %v1927, %v1928
        %vm1934 = vcmask 1041409
        %v1935 = vsel %vm1934, %v1903, %v1890
        %vm1936 = vcmask 1042434
        %v1937 = vsel %vm1936, %v1916, %v1935
        %vm1938 = vcmask 1043459
        %v1939 = vsel %vm1938, %v1929, %v1937
        %vm1941 = vcmask 396288
        %v1942 = vsel %vm1941, %v1939, 0.0
        %1943 = vadd.xlane.f32.xlu0 %v1942
        %v1944 = vpop.xlane.xlu0 %1943
        %v1945 = vld [vmem:[%s6] sm:$0x1]
        %v1946 = vld [vmem:[%s7] sm:$0xf]
        %v1947 = vmul.f32 %v1944, %v1946
        %v1948 = vsel %vm1616, %v1947, 0.0
        %v1949 = vrot.slane %v1948, 4
        %v1950 = vadd.f32 %v1948, %v1949
        %v1951 = vrot.slane %v1950, 2
        %v1952 = vadd.f32 %v1950, %v1951
        %v1953 = vrot.slane %v1952, 1
        %v1954 = vadd.f32 %v1952, %v1953
        %v1955 = vadd.f32 %v1945, %v1954
        %1956 = vst [vmem:[%s297] sm:$0x1] %v1955
        %s1957 = sand.u32 %s203, 1
        %s1958 = scalar_lea.sflag [#allocation3], %s1957
        %s1959 = sand.u32 %s203, 1
        %s1960 = scalar_lea.vmem [#allocation2], %s1959
        // Predicated region
        $region53: #{convnet_forward.1} parent=51 // pred_check
          %p1961 = pneg %p213
        $region54: #{convnet_forward.1} parent=51 // pred_check_branch
          %1963 = sbr.rel (%p1961) target = $region56
        $region55: #{convnet_forward.1} parent=51 // pred_region
          %s1965 = ssub.s32 16, 16
          %1966 = vsyncadd %s1958, %s1965
          %s1967 = smul.addr %s22, 16
          %s1968 = scalar_lea.hbm %s8, %s1967
          %s1970 = sshll.u32 %s1960, 4
          %s1971 = int_to_ptr.vmem [resolvable:$true] %s1970
          %1973 = dma.vmem_to_hbm [thread:$0]  %s1971, 16, %s1968, %s1958
        $region56: #{convnet_forward.1} parent=51 // pred_fallthru
          _
      $region52: #{convnet_forward.1} parent=5 // pred_fallthru
        _
      %p1974 = scmp.le.s32.totalorder 2, %s17
      // Predicated region
      $region57: #{convnet_forward.1} parent=5 // pred_check
        %p1975 = pneg %p1974
      $region58: #{convnet_forward.1} parent=5 // pred_check_branch
        %1977 = sbr.rel (%p1975) target = $region60
      $region59: #{convnet_forward.1} parent=5 // pred_region
        %s1978 = ssub.s32 %s17, 2
        // Predicated region
        $region61: #{convnet_forward.1} parent=59 // pred_check
          %p1979 = pneg %p219
        $region62: #{convnet_forward.1} parent=59 // pred_check_branch
          %1981 = sbr.rel (%p1979) target = $region64
        $region63: #{convnet_forward.1} parent=59 // pred_region
          %s1982 = sand.u32 %s204, 1
          %s1983 = scalar_lea.sflag [#allocation3], %s1982
          %s1984 = sand.u32 %s204, 1
          %s1985 = scalar_lea.vmem [#allocation2], %s1984
          %1986 = dma.done %s1983, 16
        $region64: #{convnet_forward.1} parent=59 // pred_fallthru
          _
      $region60: #{convnet_forward.1} parent=5 // pred_fallthru
        _
    $region6: #{convnet_forward.1} parent=1 // loop_footer
      %s21 = sadd.s32 1, %s17
    $region7: #{convnet_forward.1} parent=1 // loop_footer_branch
      %16 = sbr.rel target = $region3
    $region8: #{convnet_forward.1} parent=1 // loop_exit
      _
    %1987 = vsyncpa [#allocation3], 1
    %s1988 = scalar_lea.sflag [#allocation3], 1
    %1989 = vsyncpa %s1988, 1

</llo_original>
